<compile_context>
chip_gen: v7x
topology: tpu7x:2x2x1
jax: 0.10.0
libtpu: 0.0.40
codegen_flags: <defaults>
</compile_context>

<pallas_src>
import numpy as np
import jax
import jax.numpy as jnp
from jax import lax
from jax.experimental import pallas as pl
from jax.experimental.pallas import tpu as pltpu


# ------------------------------ model constants ------------------------------

IN_CHANNELS = 6      # the PyTorch __init__ probes with a (1, 6, 10, 10) example
NUM_ACTIONS = 6
H_IN = W_IN = 10
KH = KW = 3
OH, OW = H_IN - KH + 1, W_IN - KW + 1          # 8, 8
P = OH * OW                                    # 64 output positions per image
CONV_OUT = 16
FLAT = CONV_OUT * P                            # 1024 (PyTorch flatten width)
HIDDEN = 128
IN_FLAT = IN_CHANNELS * H_IN * W_IN            # 600 raw input features per image
IN_FLAT_PAD = 640                              # 600 -> 640 (5*128, lane-dense);
                                               # column 600 carries the folded conv bias
OUT_PAD = 128                                  # lane-dense padded output width
MAX_B_TILE = 1024                              # rows-of-batch per grid step


# ------------------------------- Pallas kernel -------------------------------


def _qnet_fused_kernel(x_ref, wc_ref, w1_ref, b1_ref, w2_ref, b2_ref, o_ref):
    """Fused conv(as dense matmul, bias folded)+relu -> fc1+relu -> fc2.

    x_ref : (bt, 640)    bf16  flattened raw input, col 600 == 1.0 (bias column)
    wc_ref: (640, 1024)  bf16  dense conv matrix, output cols in (c, oh, ow) order
    w1_ref: (1024, 128)  bf16  fc1 weight (transposed, no permutation needed)
    b1_ref: (1, 128)     f32
    w2_ref: (128, 128)   bf16  fc2 weight, zero-padded 6 -> 128 output cols
    b2_ref: (1, 128)     f32   zero-padded
    o_ref : (bt, 128)    f32
    """
    # conv + bias (folded into row 600 of wc) + relu, f32 accumulate on the MXU
    h = jnp.dot(x_ref[...], wc_ref[...], preferred_element_type=jnp.float32)
    h = jnp.maximum(h, 0.0).astype(jnp.bfloat16)                 # (bt, 1024) lane-dense

    # fc1 + relu
    z = jnp.dot(h, w1_ref[...], preferred_element_type=jnp.float32) + b1_ref[...]
    z = jnp.maximum(z, 0.0).astype(jnp.bfloat16)                 # (bt, 128)

    # fc2 (padded to 128 output lanes)
    out = jnp.dot(z, w2_ref[...], preferred_element_type=jnp.float32) + b2_ref[...]
    o_ref[...] = out.astype(o_ref.dtype)


# ------------------------------- glue / model --------------------------------


def _round_up(x, m):
    return -(-x // m) * m


def _choose_bt(B, max_tile=MAX_B_TILE):
    """Batch-tile rows: multiple of 8; >=2 grid steps for large B (v7x megacore)."""
    if B <= 16:
        return max(_round_up(B, 8), 8)
    return min(max_tile, _round_up(-(-B // 2), 8))


def init_params(key):
    ks = jax.random.split(key, 6)
    s = 0.05
    return {
        "conv_w": jax.random.normal(ks[0], (CONV_OUT, IN_CHANNELS, KH, KW), jnp.float32) * s,
        "conv_b": jax.random.normal(ks[1], (CONV_OUT,), jnp.float32) * s,
        "fc1_w": jax.random.normal(ks[2], (HIDDEN, FLAT), jnp.float32) * s,
        "fc1_b": jax.random.normal(ks[3], (HIDDEN,), jnp.float32) * s,
        "fc2_w": jax.random.normal(ks[4], (NUM_ACTIONS, HIDDEN), jnp.float32) * s,
        "fc2_b": jax.random.normal(ks[5], (NUM_ACTIONS,), jnp.float32) * s,
    }


def _build_dense_conv(conv_w, conv_b):
    """Fold conv weight + bias into a (640, 1024) matrix.

    Row index   = c_in*100 + h*10 + w   (row 600 is the bias row, rows 601..639 zero)
    Column index= c_out*64 + oh*8 + ow  (== PyTorch's (C, H, W) flatten of the conv out)
    """
    co, ci, kh, kw = np.meshgrid(np.arange(CONV_OUT), np.arange(IN_CHANNELS),
                                 np.arange(KH), np.arange(KW), indexing="ij")
    oh, ow = np.meshgrid(np.arange(OH), np.arange(OW), indexing="ij")
    rows = (ci[..., None, None] * (H_IN * W_IN)
            + (kh[..., None, None] + oh) * W_IN
            + (kw[..., None, None] + ow))                        # (16,6,3,3,8,8)
    cols = (co[..., None, None] * P + oh * OW + ow)              # (16,6,3,3,8,8)
    vals = jnp.broadcast_to(conv_w[..., None, None], rows.shape)

    dense = jnp.zeros((IN_FLAT_PAD, FLAT), jnp.float32)
    dense = dense.at[rows, cols].set(vals)                       # collision-free scatter
    dense = dense.at[IN_FLAT, :].set(jnp.repeat(conv_b, P))      # folded bias row
    return dense.astype(jnp.bfloat16)


def prepare_params(params):
    """One-time weight preprocessing (hoisted out of the forward path)."""
    wc = _build_dense_conv(params["conv_w"], params["conv_b"])   # (640, 1024) bf16

    w1 = params["fc1_w"].T.astype(jnp.bfloat16)                  # (1024, 128)
    b1 = params["fc1_b"].reshape(1, HIDDEN).astype(jnp.float32)

    w2 = jnp.pad(params["fc2_w"].T,
                 ((0, 0), (0, OUT_PAD - NUM_ACTIONS))).astype(jnp.bfloat16)   # (128, 128)
    b2 = jnp.pad(params["fc2_b"], (0, OUT_PAD - NUM_ACTIONS)).reshape(1, OUT_PAD)
    b2 = b2.astype(jnp.float32)

    return {"wc": wc, "w1": w1, "b1": b1, "w2": w2, "b2": b2}


def qnetwork_forward(x, prep, max_b_tile=MAX_B_TILE):
    B = x.shape[0]
    bt = _choose_bt(B, max_b_tile)
    n_tiles = -(-B // bt)
    b_pad = n_tiles * bt

    # raw input stream: flatten (C,H,W), bf16, append the 1.0 bias column, pad to 640
    xf = x.reshape(B, IN_FLAT).astype(jnp.bfloat16)
    xf = jnp.concatenate([xf, jnp.ones((B, 1), jnp.bfloat16)], axis=1)   # col 600 = 1.0
    xf = jnp.pad(xf, ((0, b_pad - B), (0, IN_FLAT_PAD - IN_FLAT - 1)))   # (b_pad, 640)

    out = pl.pallas_call(
        _qnet_fused_kernel,
        out_shape=jax.ShapeDtypeStruct((b_pad, OUT_PAD), jnp.float32),
        grid=(n_tiles,),
        in_specs=[
            # streamed per batch tile (double-buffered by Pallas)
            pl.BlockSpec((bt, IN_FLAT_PAD), lambda i: (i, 0)),
            # weights/biases: constant index_map -> VMEM-resident across the grid
            pl.BlockSpec((IN_FLAT_PAD, FLAT), lambda i: (0, 0)),
            pl.BlockSpec((FLAT, HIDDEN), lambda i: (0, 0)),
            pl.BlockSpec((1, HIDDEN), lambda i: (0, 0)),
            pl.BlockSpec((HIDDEN, OUT_PAD), lambda i: (0, 0)),
            pl.BlockSpec((1, OUT_PAD), lambda i: (0, 0)),
        ],
        out_specs=pl.BlockSpec((bt, OUT_PAD), lambda i: (i, 0)),
        compiler_params=pltpu.CompilerParams(
            dimension_semantics=("parallel",),        # both TCs on v7x when n_tiles >= 2
            vmem_limit_bytes=48 * 1024 * 1024,        # ~14 MiB needed at bt=1024 incl. padding
        ),
    )(xf, prep["wc"], prep["w1"], prep["b1"], prep["w2"], prep["b2"])

    return out[:B, :NUM_ACTIONS]


def reference_forward(x, params):
    """Pure-f32 reference with PyTorch semantics."""
    y = lax.conv_general_dilated(
        x, params["conv_w"], window_strides=(1, 1), padding="VALID",
        dimension_numbers=("NCHW", "OIHW", "NCHW"))
    y = jnp.maximum(y + params["conv_b"].reshape(1, CONV_OUT, 1, 1), 0.0)
    y = y.reshape(x.shape[0], -1)                      # PyTorch (C, H, W) flatten
    z = jnp.maximum(y @ params["fc1_w"].T + params["fc1_b"], 0.0)
    return z @ params["fc2_w"].T + params["fc2_b"]


if __name__ == "__main__":
    key = jax.random.PRNGKey(0)
    k_x, k_p = jax.random.split(key)

    x = jax.random.normal(k_x, (2, IN_CHANNELS, H_IN, W_IN), jnp.float32)
    params = init_params(k_p)
    prep = prepare_params(params)

    fwd = jax.jit(qnetwork_forward)
    out = jax.block_until_ready(fwd(x, prep))

    ref = reference_forward(x, params)
    assert out.shape == (2, NUM_ACTIONS)
    # bf16 weights/activations -> looser tolerance than the f32 reference
    assert jnp.allclose(out, ref, atol=2e-2, rtol=2e-2), "mismatch vs reference"

    print("KERNEL_OK")
</pallas_src>

<mosaic_0001>
module attributes {stable_mosaic.version = 11 : i64} {
  func.func @_qnet_fused_kernel(%arg0: i32, %arg1: memref<8x640xbf16, #tpu.memory_space<vmem>>, %arg2: memref<640x1024xbf16, #tpu.memory_space<vmem>>, %arg3: memref<1024x128xbf16, #tpu.memory_space<vmem>>, %arg4: memref<1x128xf32, #tpu.memory_space<vmem>>, %arg5: memref<128x128xbf16, #tpu.memory_space<vmem>>, %arg6: memref<1x128xf32, #tpu.memory_space<vmem>>, %arg7: memref<8x128xf32, #tpu.memory_space<vmem>>) attributes {dimension_semantics = [#tpu.dimension_semantics<parallel>], iteration_bounds = array<i64: 1>, scalar_prefetch = 0 : i64, scratch_operands = 0 : i64, tpu.core_type = #tpu.core_type<tc>, window_params = [{transform_indices = @transform_0, window_bounds = array<i64: 8, 640>}, {pipeline_mode = #tpu.pipeline_mode<synchronous>, transform_indices = @transform_1, window_bounds = array<i64: 640, 1024>}, {pipeline_mode = #tpu.pipeline_mode<synchronous>, transform_indices = @transform_2, window_bounds = array<i64: 1024, 128>}, {pipeline_mode = #tpu.pipeline_mode<synchronous>, transform_indices = @transform_3, window_bounds = array<i64: 1, 128>}, {pipeline_mode = #tpu.pipeline_mode<synchronous>, transform_indices = @transform_4, window_bounds = array<i64: 128, 128>}, {pipeline_mode = #tpu.pipeline_mode<synchronous>, transform_indices = @transform_5, window_bounds = array<i64: 1, 128>}, {transform_indices = @transform_6, window_bounds = array<i64: 8, 128>}]} {
    %c0 = arith.constant 0 : index
    %c0_0 = arith.constant 0 : index
    %0 = vector.load %arg1[%c0, %c0_0] : memref<8x640xbf16, #tpu.memory_space<vmem>>, vector<8x640xbf16>
    %c0_1 = arith.constant 0 : index
    %c0_2 = arith.constant 0 : index
    %1 = vector.load %arg2[%c0_1, %c0_2] : memref<640x1024xbf16, #tpu.memory_space<vmem>>, vector<640x1024xbf16>
    %cst = arith.constant dense<0.000000e+00> : vector<8x1024xf32>
    %2 = tpu.matmul %0, %1, %cst {dimension_numbers = #tpu.dot_dimension_numbers<[1], [0], [0], [1], [0, 0, 1, 1], [], []>} : vector<8x640xbf16>, vector<640x1024xbf16>, vector<8x1024xf32> -> vector<8x1024xf32>
    %cst_3 = arith.constant 0.000000e+00 : f32
    %3 = vector.broadcast %cst_3 : f32 to vector<8x1024xf32>
    %4 = arith.maximumf %2, %3 : vector<8x1024xf32>
    %5 = arith.truncf %4 : vector<8x1024xf32> to vector<8x1024xbf16>
    %c0_4 = arith.constant 0 : index
    %c0_5 = arith.constant 0 : index
    %6 = vector.load %arg3[%c0_4, %c0_5] : memref<1024x128xbf16, #tpu.memory_space<vmem>>, vector<1024x128xbf16>
    %cst_6 = arith.constant dense<0.000000e+00> : vector<8x128xf32>
    %7 = tpu.matmul %5, %6, %cst_6 {dimension_numbers = #tpu.dot_dimension_numbers<[1], [0], [0], [1], [0, 0, 1, 1], [], []>} : vector<8x1024xbf16>, vector<1024x128xbf16>, vector<8x128xf32> -> vector<8x128xf32>
    %c0_7 = arith.constant 0 : index
    %c0_8 = arith.constant 0 : index
    %8 = vector.load %arg4[%c0_7, %c0_8] : memref<1x128xf32, #tpu.memory_space<vmem>>, vector<1x128xf32>
    %9 = vector.broadcast %8 : vector<1x128xf32> to vector<8x128xf32>
    %10 = arith.addf %7, %9 : vector<8x128xf32>
    %cst_9 = arith.constant 0.000000e+00 : f32
    %11 = vector.broadcast %cst_9 : f32 to vector<8x128xf32>
    %12 = arith.maximumf %10, %11 : vector<8x128xf32>
    %13 = arith.truncf %12 : vector<8x128xf32> to vector<8x128xbf16>
    %c0_10 = arith.constant 0 : index
    %c0_11 = arith.constant 0 : index
    %14 = vector.load %arg5[%c0_10, %c0_11] : memref<128x128xbf16, #tpu.memory_space<vmem>>, vector<128x128xbf16>
    %cst_12 = arith.constant dense<0.000000e+00> : vector<8x128xf32>
    %15 = tpu.matmul %13, %14, %cst_12 {dimension_numbers = #tpu.dot_dimension_numbers<[1], [0], [0], [1], [0, 0, 1, 1], [], []>} : vector<8x128xbf16>, vector<128x128xbf16>, vector<8x128xf32> -> vector<8x128xf32>
    %c0_13 = arith.constant 0 : index
    %c0_14 = arith.constant 0 : index
    %16 = vector.load %arg6[%c0_13, %c0_14] : memref<1x128xf32, #tpu.memory_space<vmem>>, vector<1x128xf32>
    %17 = vector.broadcast %16 : vector<1x128xf32> to vector<8x128xf32>
    %18 = arith.addf %15, %17 : vector<8x128xf32>
    %c0_15 = arith.constant 0 : index
    %c0_16 = arith.constant 0 : index
    %19 = vector.load %arg7[%c0_15, %c0_16] : memref<8x128xf32, #tpu.memory_space<vmem>>, vector<8x128xf32>
    tpu.vector_store %arg7[%c0_15, %c0_16], %18 {strides = array<i32>} : memref<8x128xf32, #tpu.memory_space<vmem>>, vector<8x128xf32>,
    return
  }
  func.func @transform_0(%arg0: i32) -> (i32, i32) {
    %c0_i32 = arith.constant 0 : i32
    %c0_i32_0 = arith.constant 0 : i32
    return %arg0, %c0_i32 : i32, i32
  }
  func.func @transform_1(%arg0: i32) -> (i32, i32) {
    %c0_i32 = arith.constant 0 : i32
    %c0_i32_0 = arith.constant 0 : i32
    %c0_i32_1 = arith.constant 0 : i32
    return %c0_i32, %c0_i32_0 : i32, i32
  }
  func.func @transform_2(%arg0: i32) -> (i32, i32) {
    %c0_i32 = arith.constant 0 : i32
    %c0_i32_0 = arith.constant 0 : i32
    %c0_i32_1 = arith.constant 0 : i32
    return %c0_i32, %c0_i32_0 : i32, i32
  }
  func.func @transform_3(%arg0: i32) -> (i32, i32) {
    %c0_i32 = arith.constant 0 : i32
    %c0_i32_0 = arith.constant 0 : i32
    %c0_i32_1 = arith.constant 0 : i32
    return %c0_i32, %c0_i32_0 : i32, i32
  }
  func.func @transform_4(%arg0: i32) -> (i32, i32) {
    %c0_i32 = arith.constant 0 : i32
    %c0_i32_0 = arith.constant 0 : i32
    %c0_i32_1 = arith.constant 0 : i32
    return %c0_i32, %c0_i32_0 : i32, i32
  }
  func.func @transform_5(%arg0: i32) -> (i32, i32) {
    %c0_i32 = arith.constant 0 : i32
    %c0_i32_0 = arith.constant 0 : i32
    %c0_i32_1 = arith.constant 0 : i32
    return %c0_i32, %c0_i32_0 : i32, i32
  }
  func.func @transform_6(%arg0: i32) -> (i32, i32) {
    %c0_i32 = arith.constant 0 : i32
    %c0_i32_0 = arith.constant 0 : i32
    return %arg0, %c0_i32 : i32, i32
  }
}

</mosaic_0001>

<llo_original>
// kernel: qnetwork_forward.1
$region0: #{qnetwork_forward.1}
  #allocation0 [shape = 'u32[]', space=smem, size = 0x4, offset = 0x4, fixed_abs, tag = 'smem constant byte address 0x4 - core index']
  #allocation1 [shape = 'u32[144,128]{1,0:T(1,128)}', space=vmem, size = 0x12000, scoped, tag = 'internal scratch']
  %s0 = inlined_call_operand.vmem [shape: bf16[8,640], index: 0, kind: input, shape index: {}]
  %s1 = inlined_call_operand.hbm [shape: bf16[640,1024], index: 1, kind: input, shape index: {}]
  %s2 = inlined_call_operand.hbm [shape: bf16[1024,128], index: 2, kind: input, shape index: {}]
  %s3 = inlined_call_operand.hbm [shape: f32[1,128], index: 3, kind: input, shape index: {}]
  %s4 = inlined_call_operand.hbm [shape: bf16[128,128], index: 4, kind: input, shape index: {}]
  %s5 = inlined_call_operand.hbm [shape: f32[1,128], index: 5, kind: input, shape index: {}]
  %s6 = inlined_call_operand.vmem [shape: f32[8,128], index: 6, kind: output, shape index: {}]
  %s7 = sld [smem:[#allocation0]]
  $region54: #{qnetwork_forward.1} parent=0
    _
  %s9 = ssub.s32 1, %s7
  %s10 = scalar_select 0, %s9, %s7
  $region1: #{qnetwork_forward.1} parent=0
    #allocation2 [shape = 'u8[1310720]{0}', space=vmem, size = 0x140000, scoped, tag = 'input window, operand 1, single buffered']
    #allocation3 [shape = 's32[1]{0}', space=sflag, size = 0x4, scoped, tag = 'scoped memory for qnetwork_forward.1']
    #allocation4 [shape = 'u8[262144]{0}', space=vmem, size = 0x40000, scoped, tag = 'input window, operand 2, single buffered']
    #allocation5 [shape = 's32[1]{0}', space=sflag, size = 0x4, scoped, tag = 'scoped memory for qnetwork_forward.1']
    #allocation6 [shape = 'u8[512]{0}', space=vmem, size = 0x400, scoped, tag = 'input window, operand 3, single buffered']
    #allocation7 [shape = 'u8[32768]{0}', space=vmem, size = 0x8000, scoped, tag = 'input window, operand 4, single buffered']
    #allocation8 [shape = 's32[1]{0}', space=sflag, size = 0x4, scoped, tag = 'scoped memory for qnetwork_forward.1']
    #allocation9 [shape = 'u8[512]{0}', space=vmem, size = 0x400, scoped, tag = 'input window, operand 5, single buffered']
    %11 = vsyncpa [#allocation3], 0
    %12 = vsyncpa [#allocation5], 0
    %13 = vsyncpa [#allocation8], 0
    // Predicated region
    $region2: #{qnetwork_forward.1} parent=1 // pred_check
      _
    $region3: #{qnetwork_forward.1} parent=1 // pred_check_branch
      %15 = sbr.rel (0) target = $region5
    $region4: #{qnetwork_forward.1} parent=1 // pred_region
      _
    $region5: #{qnetwork_forward.1} parent=1 // pred_fallthru
      _
    // Predicated region
    $region6: #{qnetwork_forward.1} parent=1 // pred_check
      _
    $region7: #{qnetwork_forward.1} parent=1 // pred_check_branch
      %17 = sbr.rel (0) target = $region9
    $region8: #{qnetwork_forward.1} parent=1 // pred_region
      %s19 = ssub.s32 40960, 40960
      %20 = vsyncadd [#allocation3], %s19
      %s21 = sshll.u32 [#allocation2], 4
      %s22 = int_to_ptr.vmem [resolvable:$true] %s21
      %27 = dma.hbm_to_vmem [thread:$0]  %s1, 40960, %s22, [#allocation3], 512, 512, 32
    $region9: #{qnetwork_forward.1} parent=1 // pred_fallthru
      _
    // Predicated region
    $region10: #{qnetwork_forward.1} parent=1 // pred_check
      _
    $region11: #{qnetwork_forward.1} parent=1 // pred_check_branch
      %29 = sbr.rel (0) target = $region13
    $region12: #{qnetwork_forward.1} parent=1 // pred_region
      %s31 = ssub.s32 8192, 8192
      %32 = vsyncadd [#allocation5], %s31
      %s33 = sshll.u32 [#allocation4], 4
      %s34 = int_to_ptr.vmem [resolvable:$true] %s33
      %39 = dma.hbm_to_vmem [thread:$0]  %s2, 8192, %s34, [#allocation5], 64, 64, 4
    $region13: #{qnetwork_forward.1} parent=1 // pred_fallthru
      _
    // Predicated region
    $region14: #{qnetwork_forward.1} parent=1 // pred_check
      _
    $region15: #{qnetwork_forward.1} parent=1 // pred_check_branch
      %41 = sbr.rel (0) target = $region17
    $region16: #{qnetwork_forward.1} parent=1 // pred_region
      %s43 = ssub.s32 16, 16
      %44 = vsyncadd [#allocation5], %s43
      %s46 = sshll.u32 [#allocation6], 4
      %s47 = int_to_ptr.vmem [resolvable:$true] %s46
      %49 = dma.hbm_to_vmem [thread:$0]  %s3, 16, %s47, [#allocation5]
    $region17: #{qnetwork_forward.1} parent=1 // pred_fallthru
      _
    // Predicated region
    $region18: #{qnetwork_forward.1} parent=1 // pred_check
      _
    $region19: #{qnetwork_forward.1} parent=1 // pred_check_branch
      %51 = sbr.rel (0) target = $region21
    $region20: #{qnetwork_forward.1} parent=1 // pred_region
      %s53 = ssub.s32 1024, 1024
      %54 = vsyncadd [#allocation8], %s53
      %s55 = sshll.u32 [#allocation7], 4
      %s56 = int_to_ptr.vmem [resolvable:$true] %s55
      %61 = dma.hbm_to_vmem [thread:$0]  %s4, 1024, %s56, [#allocation8], 64, 64, 4
    $region21: #{qnetwork_forward.1} parent=1 // pred_fallthru
      _
    // Predicated region
    $region22: #{qnetwork_forward.1} parent=1 // pred_check
      _
    $region23: #{qnetwork_forward.1} parent=1 // pred_check_branch
      %63 = sbr.rel (0) target = $region25
    $region24: #{qnetwork_forward.1} parent=1 // pred_region
      %s65 = ssub.s32 16, 16
      %66 = vsyncadd [#allocation8], %s65
      %s68 = sshll.u32 [#allocation9], 4
      %s69 = int_to_ptr.vmem [resolvable:$true] %s68
      %71 = dma.hbm_to_vmem [thread:$0]  %s5, 16, %s69, [#allocation8]
    $region25: #{qnetwork_forward.1} parent=1 // pred_fallthru
      _
    // Predicated region
    $region26: #{qnetwork_forward.1} parent=1 // pred_check
      _
    $region27: #{qnetwork_forward.1} parent=1 // pred_check_branch
      %73 = sbr.rel (0) target = $region29
    $region28: #{qnetwork_forward.1} parent=1 // pred_region
      %74 = dma.done [#allocation3], 40960
    $region29: #{qnetwork_forward.1} parent=1 // pred_fallthru
      _
    // Predicated region
    $region30: #{qnetwork_forward.1} parent=1 // pred_check
      _
    $region31: #{qnetwork_forward.1} parent=1 // pred_check_branch
      %76 = sbr.rel (0) target = $region33
    $region32: #{qnetwork_forward.1} parent=1 // pred_region
      %77 = dma.done [#allocation5], 8192
    $region33: #{qnetwork_forward.1} parent=1 // pred_fallthru
      _
    // Predicated region
    $region34: #{qnetwork_forward.1} parent=1 // pred_check
      _
    $region35: #{qnetwork_forward.1} parent=1 // pred_check_branch
      %79 = sbr.rel (0) target = $region37
    $region36: #{qnetwork_forward.1} parent=1 // pred_region
      %80 = dma.done [#allocation5], 16
    $region37: #{qnetwork_forward.1} parent=1 // pred_fallthru
      _
    // Predicated region
    $region38: #{qnetwork_forward.1} parent=1 // pred_check
      _
    $region39: #{qnetwork_forward.1} parent=1 // pred_check_branch
      %82 = sbr.rel (0) target = $region41
    $region40: #{qnetwork_forward.1} parent=1 // pred_region
      %83 = dma.done [#allocation8], 1024
    $region41: #{qnetwork_forward.1} parent=1 // pred_fallthru
      _
    // Predicated region
    $region42: #{qnetwork_forward.1} parent=1 // pred_check
      _
    $region43: #{qnetwork_forward.1} parent=1 // pred_check_branch
      %85 = sbr.rel (0) target = $region45
    $region44: #{qnetwork_forward.1} parent=1 // pred_region
      %86 = dma.done [#allocation8], 16
    $region45: #{qnetwork_forward.1} parent=1 // pred_fallthru
      _
    %v88 = vld [vmem:[%s0] sm:$0xff]
    %v89 = vld [vmem:[%s0 + $0x8] sm:$0xff]
    %v90 = vld [vmem:[%s0 + $0x10] sm:$0xf]
    %v91 = vld [vmem:[#allocation2] sm:$0xff]
    %v92 = vld [vmem:[#allocation2 + $0x8] sm:$0xff]
    %v93 = vld [vmem:[#allocation2 + $0x10] sm:$0xff]
    %v94 = vld [vmem:[#allocation2 + $0x18] sm:$0xff]
    %v95 = vld [vmem:[#allocation2 + $0x20] sm:$0xff]
    %v96 = vld [vmem:[#allocation2 + $0x28] sm:$0xff]
    %v97 = vld [vmem:[#allocation2 + $0x30] sm:$0xff]
    %v98 = vld [vmem:[#allocation2 + $0x38] sm:$0xff]
    %v99 = vld [vmem:[#allocation2 + $0x40] sm:$0xff]
    %v100 = vld [vmem:[#allocation2 + $0x48] sm:$0xff]
    %v101 = vld [vmem:[#allocation2 + $0x50] sm:$0xff]
    %v102 = vld [vmem:[#allocation2 + $0x58] sm:$0xff]
    %v103 = vld [vmem:[#allocation2 + $0x60] sm:$0xff]
    %v104 = vld [vmem:[#allocation2 + $0x68] sm:$0xff]
    %v105 = vld [vmem:[#allocation2 + $0x70] sm:$0xff]
    %v106 = vld [vmem:[#allocation2 + $0x78] sm:$0xff]
    %v107 = vld [vmem:[#allocation2 + $0x80] sm:$0xff]
    %v108 = vld [vmem:[#allocation2 + $0x88] sm:$0xff]
    %v109 = vld [vmem:[#allocation2 + $0x90] sm:$0xff]
    %v110 = vld [vmem:[#allocation2 + $0x98] sm:$0xff]
    %v111 = vld [vmem:[#allocation2 + $0xa0] sm:$0xff]
    %v112 = vld [vmem:[#allocation2 + $0xa8] sm:$0xff]
    %v113 = vld [vmem:[#allocation2 + $0xb0] sm:$0xff]
    %v114 = vld [vmem:[#allocation2 + $0xb8] sm:$0xff]
    %v115 = vld [vmem:[#allocation2 + $0xc0] sm:$0xff]
    %v116 = vld [vmem:[#allocation2 + $0xc8] sm:$0xff]
    %v117 = vld [vmem:[#allocation2 + $0xd0] sm:$0xff]
    %v118 = vld [vmem:[#allocation2 + $0xd8] sm:$0xff]
    %v119 = vld [vmem:[#allocation2 + $0xe0] sm:$0xff]
    %v120 = vld [vmem:[#allocation2 + $0xe8] sm:$0xff]
    %v121 = vld [vmem:[#allocation2 + $0xf0] sm:$0xff]
    %v122 = vld [vmem:[#allocation2 + $0xf8] sm:$0xff]
    %v123 = vld [vmem:[#allocation2 + $0x100] sm:$0xff]
    %v124 = vld [vmem:[#allocation2 + $0x108] sm:$0xff]
    %v125 = vld [vmem:[#allocation2 + $0x110] sm:$0xff]
    %v126 = vld [vmem:[#allocation2 + $0x118] sm:$0xff]
    %v127 = vld [vmem:[#allocation2 + $0x120] sm:$0xff]
    %v128 = vld [vmem:[#allocation2 + $0x128] sm:$0xff]
    %v129 = vld [vmem:[#allocation2 + $0x130] sm:$0xff]
    %v130 = vld [vmem:[#allocation2 + $0x138] sm:$0xff]
    %v131 = vld [vmem:[#allocation2 + $0x140] sm:$0xff]
    %v132 = vld [vmem:[#allocation2 + $0x148] sm:$0xff]
    %v133 = vld [vmem:[#allocation2 + $0x150] sm:$0xff]
    %v134 = vld [vmem:[#allocation2 + $0x158] sm:$0xff]
    %v135 = vld [vmem:[#allocation2 + $0x160] sm:$0xff]
    %v136 = vld [vmem:[#allocation2 + $0x168] sm:$0xff]
    %v137 = vld [vmem:[#allocation2 + $0x170] sm:$0xff]
    %v138 = vld [vmem:[#allocation2 + $0x178] sm:$0xff]
    %v139 = vld [vmem:[#allocation2 + $0x180] sm:$0xff]
    %v140 = vld [vmem:[#allocation2 + $0x188] sm:$0xff]
    %v141 = vld [vmem:[#allocation2 + $0x190] sm:$0xff]
    %v142 = vld [vmem:[#allocation2 + $0x198] sm:$0xff]
    %v143 = vld [vmem:[#allocation2 + $0x1a0] sm:$0xff]
    %v144 = vld [vmem:[#allocation2 + $0x1a8] sm:$0xff]
    %v145 = vld [vmem:[#allocation2 + $0x1b0] sm:$0xff]
    %v146 = vld [vmem:[#allocation2 + $0x1b8] sm:$0xff]
    %v147 = vld [vmem:[#allocation2 + $0x1c0] sm:$0xff]
    %v148 = vld [vmem:[#allocation2 + $0x1c8] sm:$0xff]
    %v149 = vld [vmem:[#allocation2 + $0x1d0] sm:$0xff]
    %v150 = vld [vmem:[#allocation2 + $0x1d8] sm:$0xff]
    %v151 = vld [vmem:[#allocation2 + $0x1e0] sm:$0xff]
    %v152 = vld [vmem:[#allocation2 + $0x1e8] sm:$0xff]
    %v153 = vld [vmem:[#allocation2 + $0x1f0] sm:$0xff]
    %v154 = vld [vmem:[#allocation2 + $0x1f8] sm:$0xff]
    %v155 = vld [vmem:[#allocation2 + $0x200] sm:$0xff]
    %v156 = vld [vmem:[#allocation2 + $0x208] sm:$0xff]
    %v157 = vld [vmem:[#allocation2 + $0x210] sm:$0xff]
    %v158 = vld [vmem:[#allocation2 + $0x218] sm:$0xff]
    %v159 = vld [vmem:[#allocation2 + $0x220] sm:$0xff]
    %v160 = vld [vmem:[#allocation2 + $0x228] sm:$0xff]
    %v161 = vld [vmem:[#allocation2 + $0x230] sm:$0xff]
    %v162 = vld [vmem:[#allocation2 + $0x238] sm:$0xff]
    %v163 = vld [vmem:[#allocation2 + $0x240] sm:$0xff]
    %v164 = vld [vmem:[#allocation2 + $0x248] sm:$0xff]
    %v165 = vld [vmem:[#allocation2 + $0x250] sm:$0xff]
    %v166 = vld [vmem:[#allocation2 + $0x258] sm:$0xff]
    %v167 = vld [vmem:[#allocation2 + $0x260] sm:$0xff]
    %v168 = vld [vmem:[#allocation2 + $0x268] sm:$0xff]
    %v169 = vld [vmem:[#allocation2 + $0x270] sm:$0xff]
    %v170 = vld [vmem:[#allocation2 + $0x278] sm:$0xff]
    %v171 = vld [vmem:[#allocation2 + $0x280] sm:$0xff]
    %v172 = vld [vmem:[#allocation2 + $0x288] sm:$0xff]
    %v173 = vld [vmem:[#allocation2 + $0x290] sm:$0xff]
    %v174 = vld [vmem:[#allocation2 + $0x298] sm:$0xff]
    %v175 = vld [vmem:[#allocation2 + $0x2a0] sm:$0xff]
    %v176 = vld [vmem:[#allocation2 + $0x2a8] sm:$0xff]
    %v177 = vld [vmem:[#allocation2 + $0x2b0] sm:$0xff]
    %v178 = vld [vmem:[#allocation2 + $0x2b8] sm:$0xff]
    %v179 = vld [vmem:[#allocation2 + $0x2c0] sm:$0xff]
    %v180 = vld [vmem:[#allocation2 + $0x2c8] sm:$0xff]
    %v181 = vld [vmem:[#allocation2 + $0x2d0] sm:$0xff]
    %v182 = vld [vmem:[#allocation2 + $0x2d8] sm:$0xff]
    %v183 = vld [vmem:[#allocation2 + $0x2e0] sm:$0xff]
    %v184 = vld [vmem:[#allocation2 + $0x2e8] sm:$0xff]
    %v185 = vld [vmem:[#allocation2 + $0x2f0] sm:$0xff]
    %v186 = vld [vmem:[#allocation2 + $0x2f8] sm:$0xff]
    %v187 = vld [vmem:[#allocation2 + $0x300] sm:$0xff]
    %v188 = vld [vmem:[#allocation2 + $0x308] sm:$0xff]
    %v189 = vld [vmem:[#allocation2 + $0x310] sm:$0xff]
    %v190 = vld [vmem:[#allocation2 + $0x318] sm:$0xff]
    %v191 = vld [vmem:[#allocation2 + $0x320] sm:$0xff]
    %v192 = vld [vmem:[#allocation2 + $0x328] sm:$0xff]
    %v193 = vld [vmem:[#allocation2 + $0x330] sm:$0xff]
    %v194 = vld [vmem:[#allocation2 + $0x338] sm:$0xff]
    %v195 = vld [vmem:[#allocation2 + $0x340] sm:$0xff]
    %v196 = vld [vmem:[#allocation2 + $0x348] sm:$0xff]
    %v197 = vld [vmem:[#allocation2 + $0x350] sm:$0xff]
    %v198 = vld [vmem:[#allocation2 + $0x358] sm:$0xff]
    %v199 = vld [vmem:[#allocation2 + $0x360] sm:$0xff]
    %v200 = vld [vmem:[#allocation2 + $0x368] sm:$0xff]
    %v201 = vld [vmem:[#allocation2 + $0x370] sm:$0xff]
    %v202 = vld [vmem:[#allocation2 + $0x378] sm:$0xff]
    %v203 = vld [vmem:[#allocation2 + $0x380] sm:$0xff]
    %v204 = vld [vmem:[#allocation2 + $0x388] sm:$0xff]
    %v205 = vld [vmem:[#allocation2 + $0x390] sm:$0xff]
    %v206 = vld [vmem:[#allocation2 + $0x398] sm:$0xff]
    %v207 = vld [vmem:[#allocation2 + $0x3a0] sm:$0xff]
    %v208 = vld [vmem:[#allocation2 + $0x3a8] sm:$0xff]
    %v209 = vld [vmem:[#allocation2 + $0x3b0] sm:$0xff]
    %v210 = vld [vmem:[#allocation2 + $0x3b8] sm:$0xff]
    %v211 = vld [vmem:[#allocation2 + $0x3c0] sm:$0xff]
    %v212 = vld [vmem:[#allocation2 + $0x3c8] sm:$0xff]
    %v213 = vld [vmem:[#allocation2 + $0x3d0] sm:$0xff]
    %v214 = vld [vmem:[#allocation2 + $0x3d8] sm:$0xff]
    %v215 = vld [vmem:[#allocation2 + $0x3e0] sm:$0xff]
    %v216 = vld [vmem:[#allocation2 + $0x3e8] sm:$0xff]
    %v217 = vld [vmem:[#allocation2 + $0x3f0] sm:$0xff]
    %v218 = vld [vmem:[#allocation2 + $0x3f8] sm:$0xff]
    %v219 = vld [vmem:[#allocation2 + $0x400] sm:$0xff]
    %v220 = vld [vmem:[#allocation2 + $0x408] sm:$0xff]
    %v221 = vld [vmem:[#allocation2 + $0x410] sm:$0xff]
    %v222 = vld [vmem:[#allocation2 + $0x418] sm:$0xff]
    %v223 = vld [vmem:[#allocation2 + $0x420] sm:$0xff]
    %v224 = vld [vmem:[#allocation2 + $0x428] sm:$0xff]
    %v225 = vld [vmem:[#allocation2 + $0x430] sm:$0xff]
    %v226 = vld [vmem:[#allocation2 + $0x438] sm:$0xff]
    %v227 = vld [vmem:[#allocation2 + $0x440] sm:$0xff]
    %v228 = vld [vmem:[#allocation2 + $0x448] sm:$0xff]
    %v229 = vld [vmem:[#allocation2 + $0x450] sm:$0xff]
    %v230 = vld [vmem:[#allocation2 + $0x458] sm:$0xff]
    %v231 = vld [vmem:[#allocation2 + $0x460] sm:$0xff]
    %v232 = vld [vmem:[#allocation2 + $0x468] sm:$0xff]
    %v233 = vld [vmem:[#allocation2 + $0x470] sm:$0xff]
    %v234 = vld [vmem:[#allocation2 + $0x478] sm:$0xff]
    %v235 = vld [vmem:[#allocation2 + $0x480] sm:$0xff]
    %v236 = vld [vmem:[#allocation2 + $0x488] sm:$0xff]
    %v237 = vld [vmem:[#allocation2 + $0x490] sm:$0xff]
    %v238 = vld [vmem:[#allocation2 + $0x498] sm:$0xff]
    %v239 = vld [vmem:[#allocation2 + $0x4a0] sm:$0xff]
    %v240 = vld [vmem:[#allocation2 + $0x4a8] sm:$0xff]
    %v241 = vld [vmem:[#allocation2 + $0x4b0] sm:$0xff]
    %v242 = vld [vmem:[#allocation2 + $0x4b8] sm:$0xff]
    %v243 = vld [vmem:[#allocation2 + $0x4c0] sm:$0xff]
    %v244 = vld [vmem:[#allocation2 + $0x4c8] sm:$0xff]
    %v245 = vld [vmem:[#allocation2 + $0x4d0] sm:$0xff]
    %v246 = vld [vmem:[#allocation2 + $0x4d8] sm:$0xff]
    %v247 = vld [vmem:[#allocation2 + $0x4e0] sm:$0xff]
    %v248 = vld [vmem:[#allocation2 + $0x4e8] sm:$0xff]
    %v249 = vld [vmem:[#allocation2 + $0x4f0] sm:$0xff]
    %v250 = vld [vmem:[#allocation2 + $0x4f8] sm:$0xff]
    %v251 = vld [vmem:[#allocation2 + $0x500] sm:$0xff]
    %v252 = vld [vmem:[#allocation2 + $0x508] sm:$0xff]
    %v253 = vld [vmem:[#allocation2 + $0x510] sm:$0xff]
    %v254 = vld [vmem:[#allocation2 + $0x518] sm:$0xff]
    %v255 = vld [vmem:[#allocation2 + $0x520] sm:$0xff]
    %v256 = vld [vmem:[#allocation2 + $0x528] sm:$0xff]
    %v257 = vld [vmem:[#allocation2 + $0x530] sm:$0xff]
    %v258 = vld [vmem:[#allocation2 + $0x538] sm:$0xff]
    %v259 = vld [vmem:[#allocation2 + $0x540] sm:$0xff]
    %v260 = vld [vmem:[#allocation2 + $0x548] sm:$0xff]
    %v261 = vld [vmem:[#allocation2 + $0x550] sm:$0xff]
    %v262 = vld [vmem:[#allocation2 + $0x558] sm:$0xff]
    %v263 = vld [vmem:[#allocation2 + $0x560] sm:$0xff]
    %v264 = vld [vmem:[#allocation2 + $0x568] sm:$0xff]
    %v265 = vld [vmem:[#allocation2 + $0x570] sm:$0xff]
    %v266 = vld [vmem:[#allocation2 + $0x578] sm:$0xff]
    %v267 = vld [vmem:[#allocation2 + $0x580] sm:$0xff]
    %v268 = vld [vmem:[#allocation2 + $0x588] sm:$0xff]
    %v269 = vld [vmem:[#allocation2 + $0x590] sm:$0xff]
    %v270 = vld [vmem:[#allocation2 + $0x598] sm:$0xff]
    %v271 = vld [vmem:[#allocation2 + $0x5a0] sm:$0xff]
    %v272 = vld [vmem:[#allocation2 + $0x5a8] sm:$0xff]
    %v273 = vld [vmem:[#allocation2 + $0x5b0] sm:$0xff]
    %v274 = vld [vmem:[#allocation2 + $0x5b8] sm:$0xff]
    %v275 = vld [vmem:[#allocation2 + $0x5c0] sm:$0xff]
    %v276 = vld [vmem:[#allocation2 + $0x5c8] sm:$0xff]
    %v277 = vld [vmem:[#allocation2 + $0x5d0] sm:$0xff]
    %v278 = vld [vmem:[#allocation2 + $0x5d8] sm:$0xff]
    %v279 = vld [vmem:[#allocation2 + $0x5e0] sm:$0xff]
    %v280 = vld [vmem:[#allocation2 + $0x5e8] sm:$0xff]
    %v281 = vld [vmem:[#allocation2 + $0x5f0] sm:$0xff]
    %v282 = vld [vmem:[#allocation2 + $0x5f8] sm:$0xff]
    %v283 = vld [vmem:[#allocation2 + $0x600] sm:$0xff]
    %v284 = vld [vmem:[#allocation2 + $0x608] sm:$0xff]
    %v285 = vld [vmem:[#allocation2 + $0x610] sm:$0xff]
    %v286 = vld [vmem:[#allocation2 + $0x618] sm:$0xff]
    %v287 = vld [vmem:[#allocation2 + $0x620] sm:$0xff]
    %v288 = vld [vmem:[#allocation2 + $0x628] sm:$0xff]
    %v289 = vld [vmem:[#allocation2 + $0x630] sm:$0xff]
    %v290 = vld [vmem:[#allocation2 + $0x638] sm:$0xff]
    %v291 = vld [vmem:[#allocation2 + $0x640] sm:$0xff]
    %v292 = vld [vmem:[#allocation2 + $0x648] sm:$0xff]
    %v293 = vld [vmem:[#allocation2 + $0x650] sm:$0xff]
    %v294 = vld [vmem:[#allocation2 + $0x658] sm:$0xff]
    %v295 = vld [vmem:[#allocation2 + $0x660] sm:$0xff]
    %v296 = vld [vmem:[#allocation2 + $0x668] sm:$0xff]
    %v297 = vld [vmem:[#allocation2 + $0x670] sm:$0xff]
    %v298 = vld [vmem:[#allocation2 + $0x678] sm:$0xff]
    %v299 = vld [vmem:[#allocation2 + $0x680] sm:$0xff]
    %v300 = vld [vmem:[#allocation2 + $0x688] sm:$0xff]
    %v301 = vld [vmem:[#allocation2 + $0x690] sm:$0xff]
    %v302 = vld [vmem:[#allocation2 + $0x698] sm:$0xff]
    %v303 = vld [vmem:[#allocation2 + $0x6a0] sm:$0xff]
    %v304 = vld [vmem:[#allocation2 + $0x6a8] sm:$0xff]
    %v305 = vld [vmem:[#allocation2 + $0x6b0] sm:$0xff]
    %v306 = vld [vmem:[#allocation2 + $0x6b8] sm:$0xff]
    %v307 = vld [vmem:[#allocation2 + $0x6c0] sm:$0xff]
    %v308 = vld [vmem:[#allocation2 + $0x6c8] sm:$0xff]
    %v309 = vld [vmem:[#allocation2 + $0x6d0] sm:$0xff]
    %v310 = vld [vmem:[#allocation2 + $0x6d8] sm:$0xff]
    %v311 = vld [vmem:[#allocation2 + $0x6e0] sm:$0xff]
    %v312 = vld [vmem:[#allocation2 + $0x6e8] sm:$0xff]
    %v313 = vld [vmem:[#allocation2 + $0x6f0] sm:$0xff]
    %v314 = vld [vmem:[#allocation2 + $0x6f8] sm:$0xff]
    %v315 = vld [vmem:[#allocation2 + $0x700] sm:$0xff]
    %v316 = vld [vmem:[#allocation2 + $0x708] sm:$0xff]
    %v317 = vld [vmem:[#allocation2 + $0x710] sm:$0xff]
    %v318 = vld [vmem:[#allocation2 + $0x718] sm:$0xff]
    %v319 = vld [vmem:[#allocation2 + $0x720] sm:$0xff]
    %v320 = vld [vmem:[#allocation2 + $0x728] sm:$0xff]
    %v321 = vld [vmem:[#allocation2 + $0x730] sm:$0xff]
    %v322 = vld [vmem:[#allocation2 + $0x738] sm:$0xff]
    %v323 = vld [vmem:[#allocation2 + $0x740] sm:$0xff]
    %v324 = vld [vmem:[#allocation2 + $0x748] sm:$0xff]
    %v325 = vld [vmem:[#allocation2 + $0x750] sm:$0xff]
    %v326 = vld [vmem:[#allocation2 + $0x758] sm:$0xff]
    %v327 = vld [vmem:[#allocation2 + $0x760] sm:$0xff]
    %v328 = vld [vmem:[#allocation2 + $0x768] sm:$0xff]
    %v329 = vld [vmem:[#allocation2 + $0x770] sm:$0xff]
    %v330 = vld [vmem:[#allocation2 + $0x778] sm:$0xff]
    %v331 = vld [vmem:[#allocation2 + $0x780] sm:$0xff]
    %v332 = vld [vmem:[#allocation2 + $0x788] sm:$0xff]
    %v333 = vld [vmem:[#allocation2 + $0x790] sm:$0xff]
    %v334 = vld [vmem:[#allocation2 + $0x798] sm:$0xff]
    %v335 = vld [vmem:[#allocation2 + $0x7a0] sm:$0xff]
    %v336 = vld [vmem:[#allocation2 + $0x7a8] sm:$0xff]
    %v337 = vld [vmem:[#allocation2 + $0x7b0] sm:$0xff]
    %v338 = vld [vmem:[#allocation2 + $0x7b8] sm:$0xff]
    %v339 = vld [vmem:[#allocation2 + $0x7c0] sm:$0xff]
    %v340 = vld [vmem:[#allocation2 + $0x7c8] sm:$0xff]
    %v341 = vld [vmem:[#allocation2 + $0x7d0] sm:$0xff]
    %v342 = vld [vmem:[#allocation2 + $0x7d8] sm:$0xff]
    %v343 = vld [vmem:[#allocation2 + $0x7e0] sm:$0xff]
    %v344 = vld [vmem:[#allocation2 + $0x7e8] sm:$0xff]
    %v345 = vld [vmem:[#allocation2 + $0x7f0] sm:$0xff]
    %v346 = vld [vmem:[#allocation2 + $0x7f8] sm:$0xff]
    %v347 = vld [vmem:[#allocation2 + $0x800] sm:$0xff]
    %v348 = vld [vmem:[#allocation2 + $0x808] sm:$0xff]
    %v349 = vld [vmem:[#allocation2 + $0x810] sm:$0xff]
    %v350 = vld [vmem:[#allocation2 + $0x818] sm:$0xff]
    %v351 = vld [vmem:[#allocation2 + $0x820] sm:$0xff]
    %v352 = vld [vmem:[#allocation2 + $0x828] sm:$0xff]
    %v353 = vld [vmem:[#allocation2 + $0x830] sm:$0xff]
    %v354 = vld [vmem:[#allocation2 + $0x838] sm:$0xff]
    %v355 = vld [vmem:[#allocation2 + $0x840] sm:$0xff]
    %v356 = vld [vmem:[#allocation2 + $0x848] sm:$0xff]
    %v357 = vld [vmem:[#allocation2 + $0x850] sm:$0xff]
    %v358 = vld [vmem:[#allocation2 + $0x858] sm:$0xff]
    %v359 = vld [vmem:[#allocation2 + $0x860] sm:$0xff]
    %v360 = vld [vmem:[#allocation2 + $0x868] sm:$0xff]
    %v361 = vld [vmem:[#allocation2 + $0x870] sm:$0xff]
    %v362 = vld [vmem:[#allocation2 + $0x878] sm:$0xff]
    %v363 = vld [vmem:[#allocation2 + $0x880] sm:$0xff]
    %v364 = vld [vmem:[#allocation2 + $0x888] sm:$0xff]
    %v365 = vld [vmem:[#allocation2 + $0x890] sm:$0xff]
    %v366 = vld [vmem:[#allocation2 + $0x898] sm:$0xff]
    %v367 = vld [vmem:[#allocation2 + $0x8a0] sm:$0xff]
    %v368 = vld [vmem:[#allocation2 + $0x8a8] sm:$0xff]
    %v369 = vld [vmem:[#allocation2 + $0x8b0] sm:$0xff]
    %v370 = vld [vmem:[#allocation2 + $0x8b8] sm:$0xff]
    %v371 = vld [vmem:[#allocation2 + $0x8c0] sm:$0xff]
    %v372 = vld [vmem:[#allocation2 + $0x8c8] sm:$0xff]
    %v373 = vld [vmem:[#allocation2 + $0x8d0] sm:$0xff]
    %v374 = vld [vmem:[#allocation2 + $0x8d8] sm:$0xff]
    %v375 = vld [vmem:[#allocation2 + $0x8e0] sm:$0xff]
    %v376 = vld [vmem:[#allocation2 + $0x8e8] sm:$0xff]
    %v377 = vld [vmem:[#allocation2 + $0x8f0] sm:$0xff]
    %v378 = vld [vmem:[#allocation2 + $0x8f8] sm:$0xff]
    %v379 = vld [vmem:[#allocation2 + $0x900] sm:$0xff]
    %v380 = vld [vmem:[#allocation2 + $0x908] sm:$0xff]
    %v381 = vld [vmem:[#allocation2 + $0x910] sm:$0xff]
    %v382 = vld [vmem:[#allocation2 + $0x918] sm:$0xff]
    %v383 = vld [vmem:[#allocation2 + $0x920] sm:$0xff]
    %v384 = vld [vmem:[#allocation2 + $0x928] sm:$0xff]
    %v385 = vld [vmem:[#allocation2 + $0x930] sm:$0xff]
    %v386 = vld [vmem:[#allocation2 + $0x938] sm:$0xff]
    %v387 = vld [vmem:[#allocation2 + $0x940] sm:$0xff]
    %v388 = vld [vmem:[#allocation2 + $0x948] sm:$0xff]
    %v389 = vld [vmem:[#allocation2 + $0x950] sm:$0xff]
    %v390 = vld [vmem:[#allocation2 + $0x958] sm:$0xff]
    %v391 = vld [vmem:[#allocation2 + $0x960] sm:$0xff]
    %v392 = vld [vmem:[#allocation2 + $0x968] sm:$0xff]
    %v393 = vld [vmem:[#allocation2 + $0x970] sm:$0xff]
    %v394 = vld [vmem:[#allocation2 + $0x978] sm:$0xff]
    %v395 = vld [vmem:[#allocation2 + $0x980] sm:$0xff]
    %v396 = vld [vmem:[#allocation2 + $0x988] sm:$0xff]
    %v397 = vld [vmem:[#allocation2 + $0x990] sm:$0xff]
    %v398 = vld [vmem:[#allocation2 + $0x998] sm:$0xff]
    %v399 = vld [vmem:[#allocation2 + $0x9a0] sm:$0xff]
    %v400 = vld [vmem:[#allocation2 + $0x9a8] sm:$0xff]
    %v401 = vld [vmem:[#allocation2 + $0x9b0] sm:$0xff]
    %v402 = vld [vmem:[#allocation2 + $0x9b8] sm:$0xff]
    %v403 = vld [vmem:[#allocation2 + $0x9c0] sm:$0xff]
    %v404 = vld [vmem:[#allocation2 + $0x9c8] sm:$0xff]
    %v405 = vld [vmem:[#allocation2 + $0x9d0] sm:$0xff]
    %v406 = vld [vmem:[#allocation2 + $0x9d8] sm:$0xff]
    %v407 = vld [vmem:[#allocation2 + $0x9e0] sm:$0xff]
    %v408 = vld [vmem:[#allocation2 + $0x9e8] sm:$0xff]
    %v409 = vld [vmem:[#allocation2 + $0x9f0] sm:$0xff]
    %v410 = vld [vmem:[#allocation2 + $0x9f8] sm:$0xff]
    %v414 = vunpack.c.l.b16 %v88
    %v415 = vunpack.c.h.b16 %v88
    %v416 = vunpack.c.l.b16 %v89
    %v417 = vunpack.c.h.b16 %v89
    %v418 = vunpack.c.l.b16 %v90
    %v419 = vpack.c.b16 %v414, %v414
    %v420 = vpack.c.b16 %v415, %v415
    %v421 = vpack.c.b16 %v416, %v416
    %v422 = vpack.c.b16 %v417, %v417
    %v423 = vpack.c.b16 %v418, %v418
    %v749 = vunpack.c.l.b16 %v91
    %v750 = vunpack.c.h.b16 %v91
    %v751 = vunpack.c.l.b16 %v92
    %v752 = vunpack.c.h.b16 %v92
    %v753 = vunpack.c.l.b16 %v93
    %v754 = vunpack.c.h.b16 %v93
    %v755 = vunpack.c.l.b16 %v94
    %v756 = vunpack.c.h.b16 %v94
    %v757 = vunpack.c.l.b16 %v95
    %v758 = vunpack.c.h.b16 %v95
    %v759 = vunpack.c.l.b16 %v96
    %v760 = vunpack.c.h.b16 %v96
    %v761 = vunpack.c.l.b16 %v97
    %v762 = vunpack.c.h.b16 %v97
    %v763 = vunpack.c.l.b16 %v98
    %v764 = vunpack.c.h.b16 %v98
    %v765 = vunpack.c.l.b16 %v99
    %v766 = vunpack.c.h.b16 %v99
    %v767 = vunpack.c.l.b16 %v100
    %v768 = vunpack.c.h.b16 %v100
    %v769 = vunpack.c.l.b16 %v101
    %v770 = vunpack.c.h.b16 %v101
    %v771 = vunpack.c.l.b16 %v102
    %v772 = vunpack.c.h.b16 %v102
    %v773 = vunpack.c.l.b16 %v103
    %v774 = vunpack.c.h.b16 %v103
    %v775 = vunpack.c.l.b16 %v104
    %v776 = vunpack.c.h.b16 %v104
    %v777 = vunpack.c.l.b16 %v105
    %v778 = vunpack.c.h.b16 %v105
    %v779 = vunpack.c.l.b16 %v106
    %v780 = vunpack.c.h.b16 %v106
    %v781 = vunpack.c.l.b16 %v107
    %v782 = vunpack.c.h.b16 %v107
    %v783 = vunpack.c.l.b16 %v108
    %v784 = vunpack.c.h.b16 %v108
    %v785 = vunpack.c.l.b16 %v109
    %v786 = vunpack.c.h.b16 %v109
    %v787 = vunpack.c.l.b16 %v110
    %v788 = vunpack.c.h.b16 %v110
    %v789 = vunpack.c.l.b16 %v111
    %v790 = vunpack.c.h.b16 %v111
    %v791 = vunpack.c.l.b16 %v112
    %v792 = vunpack.c.h.b16 %v112
    %v793 = vunpack.c.l.b16 %v113
    %v794 = vunpack.c.h.b16 %v113
    %v795 = vunpack.c.l.b16 %v114
    %v796 = vunpack.c.h.b16 %v114
    %v797 = vunpack.c.l.b16 %v115
    %v798 = vunpack.c.h.b16 %v115
    %v799 = vunpack.c.l.b16 %v116
    %v800 = vunpack.c.h.b16 %v116
    %v801 = vunpack.c.l.b16 %v117
    %v802 = vunpack.c.h.b16 %v117
    %v803 = vunpack.c.l.b16 %v118
    %v804 = vunpack.c.h.b16 %v118
    %v805 = vunpack.c.l.b16 %v119
    %v806 = vunpack.c.h.b16 %v119
    %v807 = vunpack.c.l.b16 %v120
    %v808 = vunpack.c.h.b16 %v120
    %v809 = vunpack.c.l.b16 %v121
    %v810 = vunpack.c.h.b16 %v121
    %v811 = vunpack.c.l.b16 %v122
    %v812 = vunpack.c.h.b16 %v122
    %v813 = vunpack.c.l.b16 %v123
    %v814 = vunpack.c.h.b16 %v123
    %v815 = vunpack.c.l.b16 %v124
    %v816 = vunpack.c.h.b16 %v124
    %v817 = vunpack.c.l.b16 %v125
    %v818 = vunpack.c.h.b16 %v125
    %v819 = vunpack.c.l.b16 %v126
    %v820 = vunpack.c.h.b16 %v126
    %v821 = vunpack.c.l.b16 %v127
    %v822 = vunpack.c.h.b16 %v127
    %v823 = vunpack.c.l.b16 %v128
    %v824 = vunpack.c.h.b16 %v128
    %v825 = vunpack.c.l.b16 %v129
    %v826 = vunpack.c.h.b16 %v129
    %v827 = vunpack.c.l.b16 %v130
    %v828 = vunpack.c.h.b16 %v130
    %v829 = vunpack.c.l.b16 %v131
    %v830 = vunpack.c.h.b16 %v131
    %v831 = vunpack.c.l.b16 %v132
    %v832 = vunpack.c.h.b16 %v132
    %v833 = vunpack.c.l.b16 %v133
    %v834 = vunpack.c.h.b16 %v133
    %v835 = vunpack.c.l.b16 %v134
    %v836 = vunpack.c.h.b16 %v134
    %v837 = vunpack.c.l.b16 %v135
    %v838 = vunpack.c.h.b16 %v135
    %v839 = vunpack.c.l.b16 %v136
    %v840 = vunpack.c.h.b16 %v136
    %v841 = vunpack.c.l.b16 %v137
    %v842 = vunpack.c.h.b16 %v137
    %v843 = vunpack.c.l.b16 %v138
    %v844 = vunpack.c.h.b16 %v138
    %v845 = vunpack.c.l.b16 %v139
    %v846 = vunpack.c.h.b16 %v139
    %v847 = vunpack.c.l.b16 %v140
    %v848 = vunpack.c.h.b16 %v140
    %v849 = vunpack.c.l.b16 %v141
    %v850 = vunpack.c.h.b16 %v141
    %v851 = vunpack.c.l.b16 %v142
    %v852 = vunpack.c.h.b16 %v142
    %v853 = vunpack.c.l.b16 %v143
    %v854 = vunpack.c.h.b16 %v143
    %v855 = vunpack.c.l.b16 %v144
    %v856 = vunpack.c.h.b16 %v144
    %v857 = vunpack.c.l.b16 %v145
    %v858 = vunpack.c.h.b16 %v145
    %v859 = vunpack.c.l.b16 %v146
    %v860 = vunpack.c.h.b16 %v146
    %v861 = vunpack.c.l.b16 %v147
    %v862 = vunpack.c.h.b16 %v147
    %v863 = vunpack.c.l.b16 %v148
    %v864 = vunpack.c.h.b16 %v148
    %v865 = vunpack.c.l.b16 %v149
    %v866 = vunpack.c.h.b16 %v149
    %v867 = vunpack.c.l.b16 %v150
    %v868 = vunpack.c.h.b16 %v150
    %v869 = vunpack.c.l.b16 %v151
    %v870 = vunpack.c.h.b16 %v151
    %v871 = vunpack.c.l.b16 %v152
    %v872 = vunpack.c.h.b16 %v152
    %v873 = vunpack.c.l.b16 %v153
    %v874 = vunpack.c.h.b16 %v153
    %v875 = vunpack.c.l.b16 %v154
    %v876 = vunpack.c.h.b16 %v154
    %v877 = vunpack.c.l.b16 %v155
    %v878 = vunpack.c.h.b16 %v155
    %v879 = vunpack.c.l.b16 %v156
    %v880 = vunpack.c.h.b16 %v156
    %v881 = vunpack.c.l.b16 %v157
    %v882 = vunpack.c.h.b16 %v157
    %v883 = vunpack.c.l.b16 %v158
    %v884 = vunpack.c.h.b16 %v158
    %v885 = vunpack.c.l.b16 %v159
    %v886 = vunpack.c.h.b16 %v159
    %v887 = vunpack.c.l.b16 %v160
    %v888 = vunpack.c.h.b16 %v160
    %v889 = vunpack.c.l.b16 %v161
    %v890 = vunpack.c.h.b16 %v161
    %v891 = vunpack.c.l.b16 %v162
    %v892 = vunpack.c.h.b16 %v162
    %v893 = vunpack.c.l.b16 %v163
    %v894 = vunpack.c.h.b16 %v163
    %v895 = vunpack.c.l.b16 %v164
    %v896 = vunpack.c.h.b16 %v164
    %v897 = vunpack.c.l.b16 %v165
    %v898 = vunpack.c.h.b16 %v165
    %v899 = vunpack.c.l.b16 %v166
    %v900 = vunpack.c.h.b16 %v166
    %v901 = vunpack.c.l.b16 %v167
    %v902 = vunpack.c.h.b16 %v167
    %v903 = vunpack.c.l.b16 %v168
    %v904 = vunpack.c.h.b16 %v168
    %v905 = vunpack.c.l.b16 %v169
    %v906 = vunpack.c.h.b16 %v169
    %v907 = vunpack.c.l.b16 %v170
    %v908 = vunpack.c.h.b16 %v170
    %v909 = vunpack.c.l.b16 %v171
    %v910 = vunpack.c.h.b16 %v171
    %v911 = vunpack.c.l.b16 %v172
    %v912 = vunpack.c.h.b16 %v172
    %v913 = vunpack.c.l.b16 %v173
    %v914 = vunpack.c.h.b16 %v173
    %v915 = vunpack.c.l.b16 %v174
    %v916 = vunpack.c.h.b16 %v174
    %v917 = vunpack.c.l.b16 %v175
    %v918 = vunpack.c.h.b16 %v175
    %v919 = vunpack.c.l.b16 %v176
    %v920 = vunpack.c.h.b16 %v176
    %v921 = vunpack.c.l.b16 %v177
    %v922 = vunpack.c.h.b16 %v177
    %v923 = vunpack.c.l.b16 %v178
    %v924 = vunpack.c.h.b16 %v178
    %v925 = vunpack.c.l.b16 %v179
    %v926 = vunpack.c.h.b16 %v179
    %v927 = vunpack.c.l.b16 %v180
    %v928 = vunpack.c.h.b16 %v180
    %v929 = vunpack.c.l.b16 %v181
    %v930 = vunpack.c.h.b16 %v181
    %v931 = vunpack.c.l.b16 %v182
    %v932 = vunpack.c.h.b16 %v182
    %v933 = vunpack.c.l.b16 %v183
    %v934 = vunpack.c.h.b16 %v183
    %v935 = vunpack.c.l.b16 %v184
    %v936 = vunpack.c.h.b16 %v184
    %v937 = vunpack.c.l.b16 %v185
    %v938 = vunpack.c.h.b16 %v185
    %v939 = vunpack.c.l.b16 %v186
    %v940 = vunpack.c.h.b16 %v186
    %v941 = vunpack.c.l.b16 %v187
    %v942 = vunpack.c.h.b16 %v187
    %v943 = vunpack.c.l.b16 %v188
    %v944 = vunpack.c.h.b16 %v188
    %v945 = vunpack.c.l.b16 %v189
    %v946 = vunpack.c.h.b16 %v189
    %v947 = vunpack.c.l.b16 %v190
    %v948 = vunpack.c.h.b16 %v190
    %v949 = vunpack.c.l.b16 %v191
    %v950 = vunpack.c.h.b16 %v191
    %v951 = vunpack.c.l.b16 %v192
    %v952 = vunpack.c.h.b16 %v192
    %v953 = vunpack.c.l.b16 %v193
    %v954 = vunpack.c.h.b16 %v193
    %v955 = vunpack.c.l.b16 %v194
    %v956 = vunpack.c.h.b16 %v194
    %v957 = vunpack.c.l.b16 %v195
    %v958 = vunpack.c.h.b16 %v195
    %v959 = vunpack.c.l.b16 %v196
    %v960 = vunpack.c.h.b16 %v196
    %v961 = vunpack.c.l.b16 %v197
    %v962 = vunpack.c.h.b16 %v197
    %v963 = vunpack.c.l.b16 %v198
    %v964 = vunpack.c.h.b16 %v198
    %v965 = vunpack.c.l.b16 %v199
    %v966 = vunpack.c.h.b16 %v199
    %v967 = vunpack.c.l.b16 %v200
    %v968 = vunpack.c.h.b16 %v200
    %v969 = vunpack.c.l.b16 %v201
    %v970 = vunpack.c.h.b16 %v201
    %v971 = vunpack.c.l.b16 %v202
    %v972 = vunpack.c.h.b16 %v202
    %v973 = vunpack.c.l.b16 %v203
    %v974 = vunpack.c.h.b16 %v203
    %v975 = vunpack.c.l.b16 %v204
    %v976 = vunpack.c.h.b16 %v204
    %v977 = vunpack.c.l.b16 %v205
    %v978 = vunpack.c.h.b16 %v205
    %v979 = vunpack.c.l.b16 %v206
    %v980 = vunpack.c.h.b16 %v206
    %v981 = vunpack.c.l.b16 %v207
    %v982 = vunpack.c.h.b16 %v207
    %v983 = vunpack.c.l.b16 %v208
    %v984 = vunpack.c.h.b16 %v208
    %v985 = vunpack.c.l.b16 %v209
    %v986 = vunpack.c.h.b16 %v209
    %v987 = vunpack.c.l.b16 %v210
    %v988 = vunpack.c.h.b16 %v210
    %v989 = vunpack.c.l.b16 %v211
    %v990 = vunpack.c.h.b16 %v211
    %v991 = vunpack.c.l.b16 %v212
    %v992 = vunpack.c.h.b16 %v212
    %v993 = vunpack.c.l.b16 %v213
    %v994 = vunpack.c.h.b16 %v213
    %v995 = vunpack.c.l.b16 %v214
    %v996 = vunpack.c.h.b16 %v214
    %v997 = vunpack.c.l.b16 %v215
    %v998 = vunpack.c.h.b16 %v215
    %v999 = vunpack.c.l.b16 %v216
    %v1000 = vunpack.c.h.b16 %v216
    %v1001 = vunpack.c.l.b16 %v217
    %v1002 = vunpack.c.h.b16 %v217
    %v1003 = vunpack.c.l.b16 %v218
    %v1004 = vunpack.c.h.b16 %v218
    %v1005 = vunpack.c.l.b16 %v219
    %v1006 = vunpack.c.h.b16 %v219
    %v1007 = vunpack.c.l.b16 %v220
    %v1008 = vunpack.c.h.b16 %v220
    %v1009 = vunpack.c.l.b16 %v221
    %v1010 = vunpack.c.h.b16 %v221
    %v1011 = vunpack.c.l.b16 %v222
    %v1012 = vunpack.c.h.b16 %v222
    %v1013 = vunpack.c.l.b16 %v223
    %v1014 = vunpack.c.h.b16 %v223
    %v1015 = vunpack.c.l.b16 %v224
    %v1016 = vunpack.c.h.b16 %v224
    %v1017 = vunpack.c.l.b16 %v225
    %v1018 = vunpack.c.h.b16 %v225
    %v1019 = vunpack.c.l.b16 %v226
    %v1020 = vunpack.c.h.b16 %v226
    %v1021 = vunpack.c.l.b16 %v227
    %v1022 = vunpack.c.h.b16 %v227
    %v1023 = vunpack.c.l.b16 %v228
    %v1024 = vunpack.c.h.b16 %v228
    %v1025 = vunpack.c.l.b16 %v229
    %v1026 = vunpack.c.h.b16 %v229
    %v1027 = vunpack.c.l.b16 %v230
    %v1028 = vunpack.c.h.b16 %v230
    %v1029 = vunpack.c.l.b16 %v231
    %v1030 = vunpack.c.h.b16 %v231
    %v1031 = vunpack.c.l.b16 %v232
    %v1032 = vunpack.c.h.b16 %v232
    %v1033 = vunpack.c.l.b16 %v233
    %v1034 = vunpack.c.h.b16 %v233
    %v1035 = vunpack.c.l.b16 %v234
    %v1036 = vunpack.c.h.b16 %v234
    %v1037 = vunpack.c.l.b16 %v235
    %v1038 = vunpack.c.h.b16 %v235
    %v1039 = vunpack.c.l.b16 %v236
    %v1040 = vunpack.c.h.b16 %v236
    %v1041 = vunpack.c.l.b16 %v237
    %v1042 = vunpack.c.h.b16 %v237
    %v1043 = vunpack.c.l.b16 %v238
    %v1044 = vunpack.c.h.b16 %v238
    %v1045 = vunpack.c.l.b16 %v239
    %v1046 = vunpack.c.h.b16 %v239
    %v1047 = vunpack.c.l.b16 %v240
    %v1048 = vunpack.c.h.b16 %v240
    %v1049 = vunpack.c.l.b16 %v241
    %v1050 = vunpack.c.h.b16 %v241
    %v1051 = vunpack.c.l.b16 %v242
    %v1052 = vunpack.c.h.b16 %v242
    %v1053 = vunpack.c.l.b16 %v243
    %v1054 = vunpack.c.h.b16 %v243
    %v1055 = vunpack.c.l.b16 %v244
    %v1056 = vunpack.c.h.b16 %v244
    %v1057 = vunpack.c.l.b16 %v245
    %v1058 = vunpack.c.h.b16 %v245
    %v1059 = vunpack.c.l.b16 %v246
    %v1060 = vunpack.c.h.b16 %v246
    %v1061 = vunpack.c.l.b16 %v247
    %v1062 = vunpack.c.h.b16 %v247
    %v1063 = vunpack.c.l.b16 %v248
    %v1064 = vunpack.c.h.b16 %v248
    %v1065 = vunpack.c.l.b16 %v249
    %v1066 = vunpack.c.h.b16 %v249
    %v1067 = vunpack.c.l.b16 %v250
    %v1068 = vunpack.c.h.b16 %v250
    %v1069 = vunpack.c.l.b16 %v251
    %v1070 = vunpack.c.h.b16 %v251
    %v1071 = vunpack.c.l.b16 %v252
    %v1072 = vunpack.c.h.b16 %v252
    %v1073 = vunpack.c.l.b16 %v253
    %v1074 = vunpack.c.h.b16 %v253
    %v1075 = vunpack.c.l.b16 %v254
    %v1076 = vunpack.c.h.b16 %v254
    %v1077 = vunpack.c.l.b16 %v255
    %v1078 = vunpack.c.h.b16 %v255
    %v1079 = vunpack.c.l.b16 %v256
    %v1080 = vunpack.c.h.b16 %v256
    %v1081 = vunpack.c.l.b16 %v257
    %v1082 = vunpack.c.h.b16 %v257
    %v1083 = vunpack.c.l.b16 %v258
    %v1084 = vunpack.c.h.b16 %v258
    %v1085 = vunpack.c.l.b16 %v259
    %v1086 = vunpack.c.h.b16 %v259
    %v1087 = vunpack.c.l.b16 %v260
    %v1088 = vunpack.c.h.b16 %v260
    %v1089 = vunpack.c.l.b16 %v261
    %v1090 = vunpack.c.h.b16 %v261
    %v1091 = vunpack.c.l.b16 %v262
    %v1092 = vunpack.c.h.b16 %v262
    %v1093 = vunpack.c.l.b16 %v263
    %v1094 = vunpack.c.h.b16 %v263
    %v1095 = vunpack.c.l.b16 %v264
    %v1096 = vunpack.c.h.b16 %v264
    %v1097 = vunpack.c.l.b16 %v265
    %v1098 = vunpack.c.h.b16 %v265
    %v1099 = vunpack.c.l.b16 %v266
    %v1100 = vunpack.c.h.b16 %v266
    %v1101 = vunpack.c.l.b16 %v267
    %v1102 = vunpack.c.h.b16 %v267
    %v1103 = vunpack.c.l.b16 %v268
    %v1104 = vunpack.c.h.b16 %v268
    %v1105 = vunpack.c.l.b16 %v269
    %v1106 = vunpack.c.h.b16 %v269
    %v1107 = vunpack.c.l.b16 %v270
    %v1108 = vunpack.c.h.b16 %v270
    %v1109 = vunpack.c.l.b16 %v271
    %v1110 = vunpack.c.h.b16 %v271
    %v1111 = vunpack.c.l.b16 %v272
    %v1112 = vunpack.c.h.b16 %v272
    %v1113 = vunpack.c.l.b16 %v273
    %v1114 = vunpack.c.h.b16 %v273
    %v1115 = vunpack.c.l.b16 %v274
    %v1116 = vunpack.c.h.b16 %v274
    %v1117 = vunpack.c.l.b16 %v275
    %v1118 = vunpack.c.h.b16 %v275
    %v1119 = vunpack.c.l.b16 %v276
    %v1120 = vunpack.c.h.b16 %v276
    %v1121 = vunpack.c.l.b16 %v277
    %v1122 = vunpack.c.h.b16 %v277
    %v1123 = vunpack.c.l.b16 %v278
    %v1124 = vunpack.c.h.b16 %v278
    %v1125 = vunpack.c.l.b16 %v279
    %v1126 = vunpack.c.h.b16 %v279
    %v1127 = vunpack.c.l.b16 %v280
    %v1128 = vunpack.c.h.b16 %v280
    %v1129 = vunpack.c.l.b16 %v281
    %v1130 = vunpack.c.h.b16 %v281
    %v1131 = vunpack.c.l.b16 %v282
    %v1132 = vunpack.c.h.b16 %v282
    %v1133 = vunpack.c.l.b16 %v283
    %v1134 = vunpack.c.h.b16 %v283
    %v1135 = vunpack.c.l.b16 %v284
    %v1136 = vunpack.c.h.b16 %v284
    %v1137 = vunpack.c.l.b16 %v285
    %v1138 = vunpack.c.h.b16 %v285
    %v1139 = vunpack.c.l.b16 %v286
    %v1140 = vunpack.c.h.b16 %v286
    %v1141 = vunpack.c.l.b16 %v287
    %v1142 = vunpack.c.h.b16 %v287
    %v1143 = vunpack.c.l.b16 %v288
    %v1144 = vunpack.c.h.b16 %v288
    %v1145 = vunpack.c.l.b16 %v289
    %v1146 = vunpack.c.h.b16 %v289
    %v1147 = vunpack.c.l.b16 %v290
    %v1148 = vunpack.c.h.b16 %v290
    %v1149 = vunpack.c.l.b16 %v291
    %v1150 = vunpack.c.h.b16 %v291
    %v1151 = vunpack.c.l.b16 %v292
    %v1152 = vunpack.c.h.b16 %v292
    %v1153 = vunpack.c.l.b16 %v293
    %v1154 = vunpack.c.h.b16 %v293
    %v1155 = vunpack.c.l.b16 %v294
    %v1156 = vunpack.c.h.b16 %v294
    %v1157 = vunpack.c.l.b16 %v295
    %v1158 = vunpack.c.h.b16 %v295
    %v1159 = vunpack.c.l.b16 %v296
    %v1160 = vunpack.c.h.b16 %v296
    %v1161 = vunpack.c.l.b16 %v297
    %v1162 = vunpack.c.h.b16 %v297
    %v1163 = vunpack.c.l.b16 %v298
    %v1164 = vunpack.c.h.b16 %v298
    %v1165 = vunpack.c.l.b16 %v299
    %v1166 = vunpack.c.h.b16 %v299
    %v1167 = vunpack.c.l.b16 %v300
    %v1168 = vunpack.c.h.b16 %v300
    %v1169 = vunpack.c.l.b16 %v301
    %v1170 = vunpack.c.h.b16 %v301
    %v1171 = vunpack.c.l.b16 %v302
    %v1172 = vunpack.c.h.b16 %v302
    %v1173 = vunpack.c.l.b16 %v303
    %v1174 = vunpack.c.h.b16 %v303
    %v1175 = vunpack.c.l.b16 %v304
    %v1176 = vunpack.c.h.b16 %v304
    %v1177 = vunpack.c.l.b16 %v305
    %v1178 = vunpack.c.h.b16 %v305
    %v1179 = vunpack.c.l.b16 %v306
    %v1180 = vunpack.c.h.b16 %v306
    %v1181 = vunpack.c.l.b16 %v307
    %v1182 = vunpack.c.h.b16 %v307
    %v1183 = vunpack.c.l.b16 %v308
    %v1184 = vunpack.c.h.b16 %v308
    %v1185 = vunpack.c.l.b16 %v309
    %v1186 = vunpack.c.h.b16 %v309
    %v1187 = vunpack.c.l.b16 %v310
    %v1188 = vunpack.c.h.b16 %v310
    %v1189 = vunpack.c.l.b16 %v311
    %v1190 = vunpack.c.h.b16 %v311
    %v1191 = vunpack.c.l.b16 %v312
    %v1192 = vunpack.c.h.b16 %v312
    %v1193 = vunpack.c.l.b16 %v313
    %v1194 = vunpack.c.h.b16 %v313
    %v1195 = vunpack.c.l.b16 %v314
    %v1196 = vunpack.c.h.b16 %v314
    %v1197 = vunpack.c.l.b16 %v315
    %v1198 = vunpack.c.h.b16 %v315
    %v1199 = vunpack.c.l.b16 %v316
    %v1200 = vunpack.c.h.b16 %v316
    %v1201 = vunpack.c.l.b16 %v317
    %v1202 = vunpack.c.h.b16 %v317
    %v1203 = vunpack.c.l.b16 %v318
    %v1204 = vunpack.c.h.b16 %v318
    %v1205 = vunpack.c.l.b16 %v319
    %v1206 = vunpack.c.h.b16 %v319
    %v1207 = vunpack.c.l.b16 %v320
    %v1208 = vunpack.c.h.b16 %v320
    %v1209 = vunpack.c.l.b16 %v321
    %v1210 = vunpack.c.h.b16 %v321
    %v1211 = vunpack.c.l.b16 %v322
    %v1212 = vunpack.c.h.b16 %v322
    %v1213 = vunpack.c.l.b16 %v323
    %v1214 = vunpack.c.h.b16 %v323
    %v1215 = vunpack.c.l.b16 %v324
    %v1216 = vunpack.c.h.b16 %v324
    %v1217 = vunpack.c.l.b16 %v325
    %v1218 = vunpack.c.h.b16 %v325
    %v1219 = vunpack.c.l.b16 %v326
    %v1220 = vunpack.c.h.b16 %v326
    %v1221 = vunpack.c.l.b16 %v327
    %v1222 = vunpack.c.h.b16 %v327
    %v1223 = vunpack.c.l.b16 %v328
    %v1224 = vunpack.c.h.b16 %v328
    %v1225 = vunpack.c.l.b16 %v329
    %v1226 = vunpack.c.h.b16 %v329
    %v1227 = vunpack.c.l.b16 %v330
    %v1228 = vunpack.c.h.b16 %v330
    %v1229 = vunpack.c.l.b16 %v331
    %v1230 = vunpack.c.h.b16 %v331
    %v1231 = vunpack.c.l.b16 %v332
    %v1232 = vunpack.c.h.b16 %v332
    %v1233 = vunpack.c.l.b16 %v333
    %v1234 = vunpack.c.h.b16 %v333
    %v1235 = vunpack.c.l.b16 %v334
    %v1236 = vunpack.c.h.b16 %v334
    %v1237 = vunpack.c.l.b16 %v335
    %v1238 = vunpack.c.h.b16 %v335
    %v1239 = vunpack.c.l.b16 %v336
    %v1240 = vunpack.c.h.b16 %v336
    %v1241 = vunpack.c.l.b16 %v337
    %v1242 = vunpack.c.h.b16 %v337
    %v1243 = vunpack.c.l.b16 %v338
    %v1244 = vunpack.c.h.b16 %v338
    %v1245 = vunpack.c.l.b16 %v339
    %v1246 = vunpack.c.h.b16 %v339
    %v1247 = vunpack.c.l.b16 %v340
    %v1248 = vunpack.c.h.b16 %v340
    %v1249 = vunpack.c.l.b16 %v341
    %v1250 = vunpack.c.h.b16 %v341
    %v1251 = vunpack.c.l.b16 %v342
    %v1252 = vunpack.c.h.b16 %v342
    %v1253 = vunpack.c.l.b16 %v343
    %v1254 = vunpack.c.h.b16 %v343
    %v1255 = vunpack.c.l.b16 %v344
    %v1256 = vunpack.c.h.b16 %v344
    %v1257 = vunpack.c.l.b16 %v345
    %v1258 = vunpack.c.h.b16 %v345
    %v1259 = vunpack.c.l.b16 %v346
    %v1260 = vunpack.c.h.b16 %v346
    %v1261 = vunpack.c.l.b16 %v347
    %v1262 = vunpack.c.h.b16 %v347
    %v1263 = vunpack.c.l.b16 %v348
    %v1264 = vunpack.c.h.b16 %v348
    %v1265 = vunpack.c.l.b16 %v349
    %v1266 = vunpack.c.h.b16 %v349
    %v1267 = vunpack.c.l.b16 %v350
    %v1268 = vunpack.c.h.b16 %v350
    %v1269 = vunpack.c.l.b16 %v351
    %v1270 = vunpack.c.h.b16 %v351
    %v1271 = vunpack.c.l.b16 %v352
    %v1272 = vunpack.c.h.b16 %v352
    %v1273 = vunpack.c.l.b16 %v353
    %v1274 = vunpack.c.h.b16 %v353
    %v1275 = vunpack.c.l.b16 %v354
    %v1276 = vunpack.c.h.b16 %v354
    %v1277 = vunpack.c.l.b16 %v355
    %v1278 = vunpack.c.h.b16 %v355
    %v1279 = vunpack.c.l.b16 %v356
    %v1280 = vunpack.c.h.b16 %v356
    %v1281 = vunpack.c.l.b16 %v357
    %v1282 = vunpack.c.h.b16 %v357
    %v1283 = vunpack.c.l.b16 %v358
    %v1284 = vunpack.c.h.b16 %v358
    %v1285 = vunpack.c.l.b16 %v359
    %v1286 = vunpack.c.h.b16 %v359
    %v1287 = vunpack.c.l.b16 %v360
    %v1288 = vunpack.c.h.b16 %v360
    %v1289 = vunpack.c.l.b16 %v361
    %v1290 = vunpack.c.h.b16 %v361
    %v1291 = vunpack.c.l.b16 %v362
    %v1292 = vunpack.c.h.b16 %v362
    %v1293 = vunpack.c.l.b16 %v363
    %v1294 = vunpack.c.h.b16 %v363
    %v1295 = vunpack.c.l.b16 %v364
    %v1296 = vunpack.c.h.b16 %v364
    %v1297 = vunpack.c.l.b16 %v365
    %v1298 = vunpack.c.h.b16 %v365
    %v1299 = vunpack.c.l.b16 %v366
    %v1300 = vunpack.c.h.b16 %v366
    %v1301 = vunpack.c.l.b16 %v367
    %v1302 = vunpack.c.h.b16 %v367
    %v1303 = vunpack.c.l.b16 %v368
    %v1304 = vunpack.c.h.b16 %v368
    %v1305 = vunpack.c.l.b16 %v369
    %v1306 = vunpack.c.h.b16 %v369
    %v1307 = vunpack.c.l.b16 %v370
    %v1308 = vunpack.c.h.b16 %v370
    %v1309 = vunpack.c.l.b16 %v371
    %v1310 = vunpack.c.h.b16 %v371
    %v1311 = vunpack.c.l.b16 %v372
    %v1312 = vunpack.c.h.b16 %v372
    %v1313 = vunpack.c.l.b16 %v373
    %v1314 = vunpack.c.h.b16 %v373
    %v1315 = vunpack.c.l.b16 %v374
    %v1316 = vunpack.c.h.b16 %v374
    %v1317 = vunpack.c.l.b16 %v375
    %v1318 = vunpack.c.h.b16 %v375
    %v1319 = vunpack.c.l.b16 %v376
    %v1320 = vunpack.c.h.b16 %v376
    %v1321 = vunpack.c.l.b16 %v377
    %v1322 = vunpack.c.h.b16 %v377
    %v1323 = vunpack.c.l.b16 %v378
    %v1324 = vunpack.c.h.b16 %v378
    %v1325 = vunpack.c.l.b16 %v379
    %v1326 = vunpack.c.h.b16 %v379
    %v1327 = vunpack.c.l.b16 %v380
    %v1328 = vunpack.c.h.b16 %v380
    %v1329 = vunpack.c.l.b16 %v381
    %v1330 = vunpack.c.h.b16 %v381
    %v1331 = vunpack.c.l.b16 %v382
    %v1332 = vunpack.c.h.b16 %v382
    %v1333 = vunpack.c.l.b16 %v383
    %v1334 = vunpack.c.h.b16 %v383
    %v1335 = vunpack.c.l.b16 %v384
    %v1336 = vunpack.c.h.b16 %v384
    %v1337 = vunpack.c.l.b16 %v385
    %v1338 = vunpack.c.h.b16 %v385
    %v1339 = vunpack.c.l.b16 %v386
    %v1340 = vunpack.c.h.b16 %v386
    %v1341 = vunpack.c.l.b16 %v387
    %v1342 = vunpack.c.h.b16 %v387
    %v1343 = vunpack.c.l.b16 %v388
    %v1344 = vunpack.c.h.b16 %v388
    %v1345 = vunpack.c.l.b16 %v389
    %v1346 = vunpack.c.h.b16 %v389
    %v1347 = vunpack.c.l.b16 %v390
    %v1348 = vunpack.c.h.b16 %v390
    %v1349 = vunpack.c.l.b16 %v391
    %v1350 = vunpack.c.h.b16 %v391
    %v1351 = vunpack.c.l.b16 %v392
    %v1352 = vunpack.c.h.b16 %v392
    %v1353 = vunpack.c.l.b16 %v393
    %v1354 = vunpack.c.h.b16 %v393
    %v1355 = vunpack.c.l.b16 %v394
    %v1356 = vunpack.c.h.b16 %v394
    %v1357 = vunpack.c.l.b16 %v395
    %v1358 = vunpack.c.h.b16 %v395
    %v1359 = vunpack.c.l.b16 %v396
    %v1360 = vunpack.c.h.b16 %v396
    %v1361 = vunpack.c.l.b16 %v397
    %v1362 = vunpack.c.h.b16 %v397
    %v1363 = vunpack.c.l.b16 %v398
    %v1364 = vunpack.c.h.b16 %v398
    %v1365 = vunpack.c.l.b16 %v399
    %v1366 = vunpack.c.h.b16 %v399
    %v1367 = vunpack.c.l.b16 %v400
    %v1368 = vunpack.c.h.b16 %v400
    %v1369 = vunpack.c.l.b16 %v401
    %v1370 = vunpack.c.h.b16 %v401
    %v1371 = vunpack.c.l.b16 %v402
    %v1372 = vunpack.c.h.b16 %v402
    %v1373 = vunpack.c.l.b16 %v403
    %v1374 = vunpack.c.h.b16 %v403
    %v1375 = vunpack.c.l.b16 %v404
    %v1376 = vunpack.c.h.b16 %v404
    %v1377 = vunpack.c.l.b16 %v405
    %v1378 = vunpack.c.h.b16 %v405
    %v1379 = vunpack.c.l.b16 %v406
    %v1380 = vunpack.c.h.b16 %v406
    %v1381 = vunpack.c.l.b16 %v407
    %v1382 = vunpack.c.h.b16 %v407
    %v1383 = vunpack.c.l.b16 %v408
    %v1384 = vunpack.c.h.b16 %v408
    %v1385 = vunpack.c.l.b16 %v409
    %v1386 = vunpack.c.h.b16 %v409
    %v1387 = vunpack.c.l.b16 %v410
    %v1388 = vunpack.c.h.b16 %v410
    %v1389 = vpack.c.b16 %v757, %v749
    %v1390 = vpack.c.b16 %v758, %v750
    %v1391 = vpack.c.b16 %v759, %v751
    %v1392 = vpack.c.b16 %v760, %v752
    %v1393 = vpack.c.b16 %v761, %v753
    %v1394 = vpack.c.b16 %v762, %v754
    %v1395 = vpack.c.b16 %v763, %v755
    %v1396 = vpack.c.b16 %v764, %v756
    %v1397 = vpack.c.b16 %v773, %v765
    %v1398 = vpack.c.b16 %v774, %v766
    %v1399 = vpack.c.b16 %v775, %v767
    %v1400 = vpack.c.b16 %v776, %v768
    %v1401 = vpack.c.b16 %v777, %v769
    %v1402 = vpack.c.b16 %v778, %v770
    %v1403 = vpack.c.b16 %v779, %v771
    %v1404 = vpack.c.b16 %v780, %v772
    %v1405 = vpack.c.b16 %v789, %v781
    %v1406 = vpack.c.b16 %v790, %v782
    %v1407 = vpack.c.b16 %v791, %v783
    %v1408 = vpack.c.b16 %v792, %v784
    %v1409 = vpack.c.b16 %v793, %v785
    %v1410 = vpack.c.b16 %v794, %v786
    %v1411 = vpack.c.b16 %v795, %v787
    %v1412 = vpack.c.b16 %v796, %v788
    %v1413 = vpack.c.b16 %v805, %v797
    %v1414 = vpack.c.b16 %v806, %v798
    %v1415 = vpack.c.b16 %v807, %v799
    %v1416 = vpack.c.b16 %v808, %v800
    %v1417 = vpack.c.b16 %v809, %v801
    %v1418 = vpack.c.b16 %v810, %v802
    %v1419 = vpack.c.b16 %v811, %v803
    %v1420 = vpack.c.b16 %v812, %v804
    %v1421 = vpack.c.b16 %v821, %v813
    %v1422 = vpack.c.b16 %v822, %v814
    %v1423 = vpack.c.b16 %v823, %v815
    %v1424 = vpack.c.b16 %v824, %v816
    %v1425 = vpack.c.b16 %v825, %v817
    %v1426 = vpack.c.b16 %v826, %v818
    %v1427 = vpack.c.b16 %v827, %v819
    %v1428 = vpack.c.b16 %v828, %v820
    %v1429 = vpack.c.b16 %v837, %v829
    %v1430 = vpack.c.b16 %v838, %v830
    %v1431 = vpack.c.b16 %v839, %v831
    %v1432 = vpack.c.b16 %v840, %v832
    %v1433 = vpack.c.b16 %v841, %v833
    %v1434 = vpack.c.b16 %v842, %v834
    %v1435 = vpack.c.b16 %v843, %v835
    %v1436 = vpack.c.b16 %v844, %v836
    %v1437 = vpack.c.b16 %v853, %v845
    %v1438 = vpack.c.b16 %v854, %v846
    %v1439 = vpack.c.b16 %v855, %v847
    %v1440 = vpack.c.b16 %v856, %v848
    %v1441 = vpack.c.b16 %v857, %v849
    %v1442 = vpack.c.b16 %v858, %v850
    %v1443 = vpack.c.b16 %v859, %v851
    %v1444 = vpack.c.b16 %v860, %v852
    %v1445 = vpack.c.b16 %v869, %v861
    %v1446 = vpack.c.b16 %v870, %v862
    %v1447 = vpack.c.b16 %v871, %v863
    %v1448 = vpack.c.b16 %v872, %v864
    %v1449 = vpack.c.b16 %v873, %v865
    %v1450 = vpack.c.b16 %v874, %v866
    %v1451 = vpack.c.b16 %v875, %v867
    %v1452 = vpack.c.b16 %v876, %v868
    %v1453 = vpack.c.b16 %v885, %v877
    %v1454 = vpack.c.b16 %v886, %v878
    %v1455 = vpack.c.b16 %v887, %v879
    %v1456 = vpack.c.b16 %v888, %v880
    %v1457 = vpack.c.b16 %v889, %v881
    %v1458 = vpack.c.b16 %v890, %v882
    %v1459 = vpack.c.b16 %v891, %v883
    %v1460 = vpack.c.b16 %v892, %v884
    %v1461 = vpack.c.b16 %v901, %v893
    %v1462 = vpack.c.b16 %v902, %v894
    %v1463 = vpack.c.b16 %v903, %v895
    %v1464 = vpack.c.b16 %v904, %v896
    %v1465 = vpack.c.b16 %v905, %v897
    %v1466 = vpack.c.b16 %v906, %v898
    %v1467 = vpack.c.b16 %v907, %v899
    %v1468 = vpack.c.b16 %v908, %v900
    %v1469 = vpack.c.b16 %v917, %v909
    %v1470 = vpack.c.b16 %v918, %v910
    %v1471 = vpack.c.b16 %v919, %v911
    %v1472 = vpack.c.b16 %v920, %v912
    %v1473 = vpack.c.b16 %v921, %v913
    %v1474 = vpack.c.b16 %v922, %v914
    %v1475 = vpack.c.b16 %v923, %v915
    %v1476 = vpack.c.b16 %v924, %v916
    %v1477 = vpack.c.b16 %v933, %v925
    %v1478 = vpack.c.b16 %v934, %v926
    %v1479 = vpack.c.b16 %v935, %v927
    %v1480 = vpack.c.b16 %v936, %v928
    %v1481 = vpack.c.b16 %v937, %v929
    %v1482 = vpack.c.b16 %v938, %v930
    %v1483 = vpack.c.b16 %v939, %v931
    %v1484 = vpack.c.b16 %v940, %v932
    %v1485 = vpack.c.b16 %v949, %v941
    %v1486 = vpack.c.b16 %v950, %v942
    %v1487 = vpack.c.b16 %v951, %v943
    %v1488 = vpack.c.b16 %v952, %v944
    %v1489 = vpack.c.b16 %v953, %v945
    %v1490 = vpack.c.b16 %v954, %v946
    %v1491 = vpack.c.b16 %v955, %v947
    %v1492 = vpack.c.b16 %v956, %v948
    %v1493 = vpack.c.b16 %v965, %v957
    %v1494 = vpack.c.b16 %v966, %v958
    %v1495 = vpack.c.b16 %v967, %v959
    %v1496 = vpack.c.b16 %v968, %v960
    %v1497 = vpack.c.b16 %v969, %v961
    %v1498 = vpack.c.b16 %v970, %v962
    %v1499 = vpack.c.b16 %v971, %v963
    %v1500 = vpack.c.b16 %v972, %v964
    %v1501 = vpack.c.b16 %v981, %v973
    %v1502 = vpack.c.b16 %v982, %v974
    %v1503 = vpack.c.b16 %v983, %v975
    %v1504 = vpack.c.b16 %v984, %v976
    %v1505 = vpack.c.b16 %v985, %v977
    %v1506 = vpack.c.b16 %v986, %v978
    %v1507 = vpack.c.b16 %v987, %v979
    %v1508 = vpack.c.b16 %v988, %v980
    %v1509 = vpack.c.b16 %v997, %v989
    %v1510 = vpack.c.b16 %v998, %v990
    %v1511 = vpack.c.b16 %v999, %v991
    %v1512 = vpack.c.b16 %v1000, %v992
    %v1513 = vpack.c.b16 %v1001, %v993
    %v1514 = vpack.c.b16 %v1002, %v994
    %v1515 = vpack.c.b16 %v1003, %v995
    %v1516 = vpack.c.b16 %v1004, %v996
    %v1517 = vpack.c.b16 %v1013, %v1005
    %v1518 = vpack.c.b16 %v1014, %v1006
    %v1519 = vpack.c.b16 %v1015, %v1007
    %v1520 = vpack.c.b16 %v1016, %v1008
    %v1521 = vpack.c.b16 %v1017, %v1009
    %v1522 = vpack.c.b16 %v1018, %v1010
    %v1523 = vpack.c.b16 %v1019, %v1011
    %v1524 = vpack.c.b16 %v1020, %v1012
    %v1525 = vpack.c.b16 %v1029, %v1021
    %v1526 = vpack.c.b16 %v1030, %v1022
    %v1527 = vpack.c.b16 %v1031, %v1023
    %v1528 = vpack.c.b16 %v1032, %v1024
    %v1529 = vpack.c.b16 %v1033, %v1025
    %v1530 = vpack.c.b16 %v1034, %v1026
    %v1531 = vpack.c.b16 %v1035, %v1027
    %v1532 = vpack.c.b16 %v1036, %v1028
    %v1533 = vpack.c.b16 %v1045, %v1037
    %v1534 = vpack.c.b16 %v1046, %v1038
    %v1535 = vpack.c.b16 %v1047, %v1039
    %v1536 = vpack.c.b16 %v1048, %v1040
    %v1537 = vpack.c.b16 %v1049, %v1041
    %v1538 = vpack.c.b16 %v1050, %v1042
    %v1539 = vpack.c.b16 %v1051, %v1043
    %v1540 = vpack.c.b16 %v1052, %v1044
    %v1541 = vpack.c.b16 %v1061, %v1053
    %v1542 = vpack.c.b16 %v1062, %v1054
    %v1543 = vpack.c.b16 %v1063, %v1055
    %v1544 = vpack.c.b16 %v1064, %v1056
    %v1545 = vpack.c.b16 %v1065, %v1057
    %v1546 = vpack.c.b16 %v1066, %v1058
    %v1547 = vpack.c.b16 %v1067, %v1059
    %v1548 = vpack.c.b16 %v1068, %v1060
    %v1549 = vpack.c.b16 %v1077, %v1069
    %v1550 = vpack.c.b16 %v1078, %v1070
    %v1551 = vpack.c.b16 %v1079, %v1071
    %v1552 = vpack.c.b16 %v1080, %v1072
    %v1553 = vpack.c.b16 %v1081, %v1073
    %v1554 = vpack.c.b16 %v1082, %v1074
    %v1555 = vpack.c.b16 %v1083, %v1075
    %v1556 = vpack.c.b16 %v1084, %v1076
    %v1557 = vpack.c.b16 %v1093, %v1085
    %v1558 = vpack.c.b16 %v1094, %v1086
    %v1559 = vpack.c.b16 %v1095, %v1087
    %v1560 = vpack.c.b16 %v1096, %v1088
    %v1561 = vpack.c.b16 %v1097, %v1089
    %v1562 = vpack.c.b16 %v1098, %v1090
    %v1563 = vpack.c.b16 %v1099, %v1091
    %v1564 = vpack.c.b16 %v1100, %v1092
    %v1565 = vpack.c.b16 %v1109, %v1101
    %v1566 = vpack.c.b16 %v1110, %v1102
    %v1567 = vpack.c.b16 %v1111, %v1103
    %v1568 = vpack.c.b16 %v1112, %v1104
    %v1569 = vpack.c.b16 %v1113, %v1105
    %v1570 = vpack.c.b16 %v1114, %v1106
    %v1571 = vpack.c.b16 %v1115, %v1107
    %v1572 = vpack.c.b16 %v1116, %v1108
    %v1573 = vpack.c.b16 %v1125, %v1117
    %v1574 = vpack.c.b16 %v1126, %v1118
    %v1575 = vpack.c.b16 %v1127, %v1119
    %v1576 = vpack.c.b16 %v1128, %v1120
    %v1577 = vpack.c.b16 %v1129, %v1121
    %v1578 = vpack.c.b16 %v1130, %v1122
    %v1579 = vpack.c.b16 %v1131, %v1123
    %v1580 = vpack.c.b16 %v1132, %v1124
    %v1581 = vpack.c.b16 %v1141, %v1133
    %v1582 = vpack.c.b16 %v1142, %v1134
    %v1583 = vpack.c.b16 %v1143, %v1135
    %v1584 = vpack.c.b16 %v1144, %v1136
    %v1585 = vpack.c.b16 %v1145, %v1137
    %v1586 = vpack.c.b16 %v1146, %v1138
    %v1587 = vpack.c.b16 %v1147, %v1139
    %v1588 = vpack.c.b16 %v1148, %v1140
    %v1589 = vpack.c.b16 %v1157, %v1149
    %v1590 = vpack.c.b16 %v1158, %v1150
    %v1591 = vpack.c.b16 %v1159, %v1151
    %v1592 = vpack.c.b16 %v1160, %v1152
    %v1593 = vpack.c.b16 %v1161, %v1153
    %v1594 = vpack.c.b16 %v1162, %v1154
    %v1595 = vpack.c.b16 %v1163, %v1155
    %v1596 = vpack.c.b16 %v1164, %v1156
    %v1597 = vpack.c.b16 %v1173, %v1165
    %v1598 = vpack.c.b16 %v1174, %v1166
    %v1599 = vpack.c.b16 %v1175, %v1167
    %v1600 = vpack.c.b16 %v1176, %v1168
    %v1601 = vpack.c.b16 %v1177, %v1169
    %v1602 = vpack.c.b16 %v1178, %v1170
    %v1603 = vpack.c.b16 %v1179, %v1171
    %v1604 = vpack.c.b16 %v1180, %v1172
    %v1605 = vpack.c.b16 %v1189, %v1181
    %v1606 = vpack.c.b16 %v1190, %v1182
    %v1607 = vpack.c.b16 %v1191, %v1183
    %v1608 = vpack.c.b16 %v1192, %v1184
    %v1609 = vpack.c.b16 %v1193, %v1185
    %v1610 = vpack.c.b16 %v1194, %v1186
    %v1611 = vpack.c.b16 %v1195, %v1187
    %v1612 = vpack.c.b16 %v1196, %v1188
    %v1613 = vpack.c.b16 %v1205, %v1197
    %v1614 = vpack.c.b16 %v1206, %v1198
    %v1615 = vpack.c.b16 %v1207, %v1199
    %v1616 = vpack.c.b16 %v1208, %v1200
    %v1617 = vpack.c.b16 %v1209, %v1201
    %v1618 = vpack.c.b16 %v1210, %v1202
    %v1619 = vpack.c.b16 %v1211, %v1203
    %v1620 = vpack.c.b16 %v1212, %v1204
    %v1621 = vpack.c.b16 %v1221, %v1213
    %v1622 = vpack.c.b16 %v1222, %v1214
    %v1623 = vpack.c.b16 %v1223, %v1215
    %v1624 = vpack.c.b16 %v1224, %v1216
    %v1625 = vpack.c.b16 %v1225, %v1217
    %v1626 = vpack.c.b16 %v1226, %v1218
    %v1627 = vpack.c.b16 %v1227, %v1219
    %v1628 = vpack.c.b16 %v1228, %v1220
    %v1629 = vpack.c.b16 %v1237, %v1229
    %v1630 = vpack.c.b16 %v1238, %v1230
    %v1631 = vpack.c.b16 %v1239, %v1231
    %v1632 = vpack.c.b16 %v1240, %v1232
    %v1633 = vpack.c.b16 %v1241, %v1233
    %v1634 = vpack.c.b16 %v1242, %v1234
    %v1635 = vpack.c.b16 %v1243, %v1235
    %v1636 = vpack.c.b16 %v1244, %v1236
    %v1637 = vpack.c.b16 %v1253, %v1245
    %v1638 = vpack.c.b16 %v1254, %v1246
    %v1639 = vpack.c.b16 %v1255, %v1247
    %v1640 = vpack.c.b16 %v1256, %v1248
    %v1641 = vpack.c.b16 %v1257, %v1249
    %v1642 = vpack.c.b16 %v1258, %v1250
    %v1643 = vpack.c.b16 %v1259, %v1251
    %v1644 = vpack.c.b16 %v1260, %v1252
    %v1645 = vpack.c.b16 %v1269, %v1261
    %v1646 = vpack.c.b16 %v1270, %v1262
    %v1647 = vpack.c.b16 %v1271, %v1263
    %v1648 = vpack.c.b16 %v1272, %v1264
    %v1649 = vpack.c.b16 %v1273, %v1265
    %v1650 = vpack.c.b16 %v1274, %v1266
    %v1651 = vpack.c.b16 %v1275, %v1267
    %v1652 = vpack.c.b16 %v1276, %v1268
    %v1653 = vpack.c.b16 %v1285, %v1277
    %v1654 = vpack.c.b16 %v1286, %v1278
    %v1655 = vpack.c.b16 %v1287, %v1279
    %v1656 = vpack.c.b16 %v1288, %v1280
    %v1657 = vpack.c.b16 %v1289, %v1281
    %v1658 = vpack.c.b16 %v1290, %v1282
    %v1659 = vpack.c.b16 %v1291, %v1283
    %v1660 = vpack.c.b16 %v1292, %v1284
    %v1661 = vpack.c.b16 %v1301, %v1293
    %v1662 = vpack.c.b16 %v1302, %v1294
    %v1663 = vpack.c.b16 %v1303, %v1295
    %v1664 = vpack.c.b16 %v1304, %v1296
    %v1665 = vpack.c.b16 %v1305, %v1297
    %v1666 = vpack.c.b16 %v1306, %v1298
    %v1667 = vpack.c.b16 %v1307, %v1299
    %v1668 = vpack.c.b16 %v1308, %v1300
    %v1669 = vpack.c.b16 %v1317, %v1309
    %v1670 = vpack.c.b16 %v1318, %v1310
    %v1671 = vpack.c.b16 %v1319, %v1311
    %v1672 = vpack.c.b16 %v1320, %v1312
    %v1673 = vpack.c.b16 %v1321, %v1313
    %v1674 = vpack.c.b16 %v1322, %v1314
    %v1675 = vpack.c.b16 %v1323, %v1315
    %v1676 = vpack.c.b16 %v1324, %v1316
    %v1677 = vpack.c.b16 %v1333, %v1325
    %v1678 = vpack.c.b16 %v1334, %v1326
    %v1679 = vpack.c.b16 %v1335, %v1327
    %v1680 = vpack.c.b16 %v1336, %v1328
    %v1681 = vpack.c.b16 %v1337, %v1329
    %v1682 = vpack.c.b16 %v1338, %v1330
    %v1683 = vpack.c.b16 %v1339, %v1331
    %v1684 = vpack.c.b16 %v1340, %v1332
    %v1685 = vpack.c.b16 %v1349, %v1341
    %v1686 = vpack.c.b16 %v1350, %v1342
    %v1687 = vpack.c.b16 %v1351, %v1343
    %v1688 = vpack.c.b16 %v1352, %v1344
    %v1689 = vpack.c.b16 %v1353, %v1345
    %v1690 = vpack.c.b16 %v1354, %v1346
    %v1691 = vpack.c.b16 %v1355, %v1347
    %v1692 = vpack.c.b16 %v1356, %v1348
    %v1693 = vpack.c.b16 %v1365, %v1357
    %v1694 = vpack.c.b16 %v1366, %v1358
    %v1695 = vpack.c.b16 %v1367, %v1359
    %v1696 = vpack.c.b16 %v1368, %v1360
    %v1697 = vpack.c.b16 %v1369, %v1361
    %v1698 = vpack.c.b16 %v1370, %v1362
    %v1699 = vpack.c.b16 %v1371, %v1363
    %v1700 = vpack.c.b16 %v1372, %v1364
    %v1701 = vpack.c.b16 %v1381, %v1373
    %v1702 = vpack.c.b16 %v1382, %v1374
    %v1703 = vpack.c.b16 %v1383, %v1375
    %v1704 = vpack.c.b16 %v1384, %v1376
    %v1705 = vpack.c.b16 %v1385, %v1377
    %v1706 = vpack.c.b16 %v1386, %v1378
    %v1707 = vpack.c.b16 %v1387, %v1379
    %v1708 = vpack.c.b16 %v1388, %v1380
    %2029 = vmatprep.subr.bf16.mxu0 %v1390
    %2030 = vmatpush1.bf16.msra.mxu0 %v1389
    %2031 = vmatprep.subr.bf16.mxu0 %v1398
    %2032 = vmatpush1.bf16.msra.mxu0 %v1397
    %2033 = vmatprep.subr.bf16.mxu0 %v1406
    %2034 = vmatpush1.bf16.msra.mxu0 %v1405
    %2035 = vmatprep.subr.bf16.mxu0 %v1414
    %2036 = vmatpush1.bf16.msra.mxu0 %v1413
    %2037 = vmatprep.subr.bf16.mxu0 %v1422
    %2038 = vmatpush1.bf16.msra.mxu0 %v1421
    %2039 = vmatprep.subr.bf16.mxu0 %v1430
    %2040 = vmatpush1.bf16.msra.mxu0 %v1429
    %2041 = vmatprep.subr.bf16.mxu0 %v1438
    %2042 = vmatpush1.bf16.msra.mxu0 %v1437
    %2043 = vmatprep.subr.bf16.mxu0 %v1446
    %2044 = vmatpush1.bf16.msra.mxu0 %v1445
    %2045 = vmatprep.subr.bf16.mxu0 %v1454
    %2046 = vmatpush1.bf16.msra.mxu0 %v1453
    %2047 = vmatprep.subr.bf16.mxu0 %v1462
    %2048 = vmatpush1.bf16.msra.mxu0 %v1461
    %2049 = vmatprep.subr.bf16.mxu0 %v1470
    %2050 = vmatpush1.bf16.msra.mxu0 %v1469
    %2051 = vmatprep.subr.bf16.mxu0 %v1478
    %2052 = vmatpush1.bf16.msra.mxu0 %v1477
    %2053 = vmatprep.subr.bf16.mxu0 %v1486
    %2054 = vmatpush1.bf16.msra.mxu0 %v1485
    %2055 = vmatprep.subr.bf16.mxu0 %v1494
    %2056 = vmatpush1.bf16.msra.mxu0 %v1493
    %2057 = vmatprep.subr.bf16.mxu0 %v1502
    %2058 = vmatpush1.bf16.msra.mxu0 %v1501
    %2059 = vmatprep.subr.bf16.mxu0 %v1510
    %2060 = vmatpush1.bf16.msra.mxu0 %v1509
    %2061 = vmatprep.mubr.bf16.mxu0 %v420
    %2062 = vmatmul.mubr.bf16.gmra.mrb[0].mxu0 %v419
    %v2063 = vpop.f32.mrb[0].mxu0
    %v2064 = vadd.f32 0.0, %v2063
    %v2065 = vpop.f32.mrb[0].mxu0
    %v2066 = vadd.f32 0.0, %v2065
    %v2067 = vpop.f32.mrb[0].mxu0
    %v2068 = vpop.f32.mrb[0].mxu0
    %2069 = vdwg.mxu0
    %2070 = vmatprep.subr.bf16.mxu0 %v1518
    %2071 = vmatpush1.bf16.msra.mxu0 %v1517
    %2072 = vmatprep.subr.bf16.mxu0 %v1526
    %2073 = vmatpush1.bf16.msra.mxu0 %v1525
    %2074 = vmatprep.subr.bf16.mxu0 %v1534
    %2075 = vmatpush1.bf16.msra.mxu0 %v1533
    %2076 = vmatprep.subr.bf16.mxu0 %v1542
    %2077 = vmatpush1.bf16.msra.mxu0 %v1541
    %2078 = vmatprep.subr.bf16.mxu0 %v1550
    %2079 = vmatpush1.bf16.msra.mxu0 %v1549
    %2080 = vmatprep.subr.bf16.mxu0 %v1558
    %2081 = vmatpush1.bf16.msra.mxu0 %v1557
    %2082 = vmatprep.subr.bf16.mxu0 %v1566
    %2083 = vmatpush1.bf16.msra.mxu0 %v1565
    %2084 = vmatprep.subr.bf16.mxu0 %v1574
    %2085 = vmatpush1.bf16.msra.mxu0 %v1573
    %2086 = vmatprep.subr.bf16.mxu0 %v1582
    %2087 = vmatpush1.bf16.msra.mxu0 %v1581
    %2088 = vmatprep.subr.bf16.mxu0 %v1590
    %2089 = vmatpush1.bf16.msra.mxu0 %v1589
    %2090 = vmatprep.subr.bf16.mxu0 %v1598
    %2091 = vmatpush1.bf16.msra.mxu0 %v1597
    %2092 = vmatprep.subr.bf16.mxu0 %v1606
    %2093 = vmatpush1.bf16.msra.mxu0 %v1605
    %2094 = vmatprep.subr.bf16.mxu0 %v1614
    %2095 = vmatpush1.bf16.msra.mxu0 %v1613
    %2096 = vmatprep.subr.bf16.mxu0 %v1622
    %2097 = vmatpush1.bf16.msra.mxu0 %v1621
    %2098 = vmatprep.subr.bf16.mxu0 %v1630
    %2099 = vmatpush1.bf16.msra.mxu0 %v1629
    %2100 = vmatprep.subr.bf16.mxu0 %v1638
    %2101 = vmatpush1.bf16.msra.mxu0 %v1637
    %2102 = vmatprep.mubr.bf16.mxu0 %v422
    %2103 = vmatmul.mubr.bf16.gmra.mrb[0].mxu0 %v421
    %v2104 = vpop.f32.mrb[0].mxu0
    %v2105 = vadd.f32 %v2064, %v2104
    %v2106 = vpop.f32.mrb[0].mxu0
    %v2107 = vadd.f32 %v2066, %v2106
    %v2108 = vpop.f32.mrb[0].mxu0
    %v2109 = vpop.f32.mrb[0].mxu0
    %2110 = vdwg.mxu0
    %2111 = vmatprep.subr.bf16.mxu0 %v1646
    %2112 = vmatpush1.bf16.msra.mxu0 %v1645
    %2113 = vmatprep.subr.bf16.mxu0 %v1654
    %2114 = vmatpush1.bf16.msra.mxu0 %v1653
    %2115 = vmatprep.subr.bf16.mxu0 %v1662
    %2116 = vmatpush1.bf16.msra.mxu0 %v1661
    %2117 = vmatprep.subr.bf16.mxu0 %v1670
    %2118 = vmatpush1.bf16.msra.mxu0 %v1669
    %2119 = vmatprep.subr.bf16.mxu0 %v1678
    %2120 = vmatpush1.bf16.msra.mxu0 %v1677
    %2121 = vmatprep.subr.bf16.mxu0 %v1686
    %2122 = vmatpush1.bf16.msra.mxu0 %v1685
    %2123 = vmatprep.subr.bf16.mxu0 %v1694
    %2124 = vmatpush1.bf16.msra.mxu0 %v1693
    %2125 = vmatprep.subr.bf16.mxu0 %v1702
    %2126 = vmatpush1.bf16.msra.mxu0 %v1701
    %2127 = vmatprep.subr.bf16.mxu0 0
    %2128 = vmatpush1.bf16.msra.mxu0 0
    %2129 = vmatprep.subr.bf16.mxu0 0
    %2130 = vmatpush1.bf16.msra.mxu0 0
    %2131 = vmatprep.subr.bf16.mxu0 0
    %2132 = vmatpush1.bf16.msra.mxu0 0
    %2133 = vmatprep.subr.bf16.mxu0 0
    %2134 = vmatpush1.bf16.msra.mxu0 0
    %2135 = vmatprep.subr.bf16.mxu0 0
    %2136 = vmatpush1.bf16.msra.mxu0 0
    %2137 = vmatprep.subr.bf16.mxu0 0
    %2138 = vmatpush1.bf16.msra.mxu0 0
    %2139 = vmatprep.subr.bf16.mxu0 0
    %2140 = vmatpush1.bf16.msra.mxu0 0
    %2141 = vmatprep.subr.bf16.mxu0 0
    %2142 = vmatpush1.bf16.msra.mxu0 0
    %2143 = vmatprep.mubr.bf16.mxu0 0
    %2144 = vmatmul.mubr.bf16.gmra.mrb[0].mxu0 %v423
    %v2145 = vpop.f32.mrb[0].mxu0
    %v2146 = vadd.f32 %v2105, %v2145
    %v2147 = vpop.f32.mrb[0].mxu0
    %v2148 = vadd.f32 %v2107, %v2147
    %v2149 = vpop.f32.mrb[0].mxu0
    %v2150 = vpop.f32.mrb[0].mxu0
    %2151 = vdwg.mxu0
    %2152 = vmatprep.subr.bf16.mxu0 %v1392
    %2153 = vmatpush1.bf16.msra.mxu0 %v1391
    %2154 = vmatprep.subr.bf16.mxu0 %v1400
    %2155 = vmatpush1.bf16.msra.mxu0 %v1399
    %2156 = vmatprep.subr.bf16.mxu0 %v1408
    %2157 = vmatpush1.bf16.msra.mxu0 %v1407
    %2158 = vmatprep.subr.bf16.mxu0 %v1416
    %2159 = vmatpush1.bf16.msra.mxu0 %v1415
    %2160 = vmatprep.subr.bf16.mxu0 %v1424
    %2161 = vmatpush1.bf16.msra.mxu0 %v1423
    %2162 = vmatprep.subr.bf16.mxu0 %v1432
    %2163 = vmatpush1.bf16.msra.mxu0 %v1431
    %2164 = vmatprep.subr.bf16.mxu0 %v1440
    %2165 = vmatpush1.bf16.msra.mxu0 %v1439
    %2166 = vmatprep.subr.bf16.mxu0 %v1448
    %2167 = vmatpush1.bf16.msra.mxu0 %v1447
    %2168 = vmatprep.subr.bf16.mxu0 %v1456
    %2169 = vmatpush1.bf16.msra.mxu0 %v1455
    %2170 = vmatprep.subr.bf16.mxu0 %v1464
    %2171 = vmatpush1.bf16.msra.mxu0 %v1463
    %2172 = vmatprep.subr.bf16.mxu0 %v1472
    %2173 = vmatpush1.bf16.msra.mxu0 %v1471
    %2174 = vmatprep.subr.bf16.mxu0 %v1480
    %2175 = vmatpush1.bf16.msra.mxu0 %v1479
    %2176 = vmatprep.subr.bf16.mxu0 %v1488
    %2177 = vmatpush1.bf16.msra.mxu0 %v1487
    %2178 = vmatprep.subr.bf16.mxu0 %v1496
    %2179 = vmatpush1.bf16.msra.mxu0 %v1495
    %2180 = vmatprep.subr.bf16.mxu0 %v1504
    %2181 = vmatpush1.bf16.msra.mxu0 %v1503
    %2182 = vmatprep.subr.bf16.mxu0 %v1512
    %2183 = vmatpush1.bf16.msra.mxu0 %v1511
    %2184 = vmatprep.mubr.bf16.mxu0 %v420
    %2185 = vmatmul.mubr.bf16.gmra.mrb[0].mxu0 %v419
    %v2186 = vpop.f32.mrb[0].mxu0
    %v2187 = vadd.f32 0.0, %v2186
    %v2188 = vpop.f32.mrb[0].mxu0
    %v2189 = vadd.f32 0.0, %v2188
    %v2190 = vpop.f32.mrb[0].mxu0
    %v2191 = vpop.f32.mrb[0].mxu0
    %2192 = vdwg.mxu0
    %2193 = vmatprep.subr.bf16.mxu0 %v1520
    %2194 = vmatpush1.bf16.msra.mxu0 %v1519
    %2195 = vmatprep.subr.bf16.mxu0 %v1528
    %2196 = vmatpush1.bf16.msra.mxu0 %v1527
    %2197 = vmatprep.subr.bf16.mxu0 %v1536
    %2198 = vmatpush1.bf16.msra.mxu0 %v1535
    %2199 = vmatprep.subr.bf16.mxu0 %v1544
    %2200 = vmatpush1.bf16.msra.mxu0 %v1543
    %2201 = vmatprep.subr.bf16.mxu0 %v1552
    %2202 = vmatpush1.bf16.msra.mxu0 %v1551
    %2203 = vmatprep.subr.bf16.mxu0 %v1560
    %2204 = vmatpush1.bf16.msra.mxu0 %v1559
    %2205 = vmatprep.subr.bf16.mxu0 %v1568
    %2206 = vmatpush1.bf16.msra.mxu0 %v1567
    %2207 = vmatprep.subr.bf16.mxu0 %v1576
    %2208 = vmatpush1.bf16.msra.mxu0 %v1575
    %2209 = vmatprep.subr.bf16.mxu0 %v1584
    %2210 = vmatpush1.bf16.msra.mxu0 %v1583
    %2211 = vmatprep.subr.bf16.mxu0 %v1592
    %2212 = vmatpush1.bf16.msra.mxu0 %v1591
    %2213 = vmatprep.subr.bf16.mxu0 %v1600
    %2214 = vmatpush1.bf16.msra.mxu0 %v1599
    %2215 = vmatprep.subr.bf16.mxu0 %v1608
    %2216 = vmatpush1.bf16.msra.mxu0 %v1607
    %2217 = vmatprep.subr.bf16.mxu0 %v1616
    %2218 = vmatpush1.bf16.msra.mxu0 %v1615
    %2219 = vmatprep.subr.bf16.mxu0 %v1624
    %2220 = vmatpush1.bf16.msra.mxu0 %v1623
    %2221 = vmatprep.subr.bf16.mxu0 %v1632
    %2222 = vmatpush1.bf16.msra.mxu0 %v1631
    %2223 = vmatprep.subr.bf16.mxu0 %v1640
    %2224 = vmatpush1.bf16.msra.mxu0 %v1639
    %2225 = vmatprep.mubr.bf16.mxu0 %v422
    %2226 = vmatmul.mubr.bf16.gmra.mrb[0].mxu0 %v421
    %v2227 = vpop.f32.mrb[0].mxu0
    %v2228 = vadd.f32 %v2187, %v2227
    %v2229 = vpop.f32.mrb[0].mxu0
    %v2230 = vadd.f32 %v2189, %v2229
    %v2231 = vpop.f32.mrb[0].mxu0
    %v2232 = vpop.f32.mrb[0].mxu0
    %2233 = vdwg.mxu0
    %2234 = vmatprep.subr.bf16.mxu0 %v1648
    %2235 = vmatpush1.bf16.msra.mxu0 %v1647
    %2236 = vmatprep.subr.bf16.mxu0 %v1656
    %2237 = vmatpush1.bf16.msra.mxu0 %v1655
    %2238 = vmatprep.subr.bf16.mxu0 %v1664
    %2239 = vmatpush1.bf16.msra.mxu0 %v1663
    %2240 = vmatprep.subr.bf16.mxu0 %v1672
    %2241 = vmatpush1.bf16.msra.mxu0 %v1671
    %2242 = vmatprep.subr.bf16.mxu0 %v1680
    %2243 = vmatpush1.bf16.msra.mxu0 %v1679
    %2244 = vmatprep.subr.bf16.mxu0 %v1688
    %2245 = vmatpush1.bf16.msra.mxu0 %v1687
    %2246 = vmatprep.subr.bf16.mxu0 %v1696
    %2247 = vmatpush1.bf16.msra.mxu0 %v1695
    %2248 = vmatprep.subr.bf16.mxu0 %v1704
    %2249 = vmatpush1.bf16.msra.mxu0 %v1703
    %2250 = vmatprep.subr.bf16.mxu0 0
    %2251 = vmatpush1.bf16.msra.mxu0 0
    %2252 = vmatprep.subr.bf16.mxu0 0
    %2253 = vmatpush1.bf16.msra.mxu0 0
    %2254 = vmatprep.subr.bf16.mxu0 0
    %2255 = vmatpush1.bf16.msra.mxu0 0
    %2256 = vmatprep.subr.bf16.mxu0 0
    %2257 = vmatpush1.bf16.msra.mxu0 0
    %2258 = vmatprep.subr.bf16.mxu0 0
    %2259 = vmatpush1.bf16.msra.mxu0 0
    %2260 = vmatprep.subr.bf16.mxu0 0
    %2261 = vmatpush1.bf16.msra.mxu0 0
    %2262 = vmatprep.subr.bf16.mxu0 0
    %2263 = vmatpush1.bf16.msra.mxu0 0
    %2264 = vmatprep.subr.bf16.mxu0 0
    %2265 = vmatpush1.bf16.msra.mxu0 0
    %2266 = vmatprep.mubr.bf16.mxu0 0
    %2267 = vmatmul.mubr.bf16.gmra.mrb[0].mxu0 %v423
    %v2268 = vpop.f32.mrb[0].mxu0
    %v2269 = vadd.f32 %v2228, %v2268
    %v2270 = vpop.f32.mrb[0].mxu0
    %v2271 = vadd.f32 %v2230, %v2270
    %v2272 = vpop.f32.mrb[0].mxu0
    %v2273 = vpop.f32.mrb[0].mxu0
    %2274 = vdwg.mxu0
    %2275 = vmatprep.subr.bf16.mxu0 %v1394
    %2276 = vmatpush1.bf16.msra.mxu0 %v1393
    %2277 = vmatprep.subr.bf16.mxu0 %v1402
    %2278 = vmatpush1.bf16.msra.mxu0 %v1401
    %2279 = vmatprep.subr.bf16.mxu0 %v1410
    %2280 = vmatpush1.bf16.msra.mxu0 %v1409
    %2281 = vmatprep.subr.bf16.mxu0 %v1418
    %2282 = vmatpush1.bf16.msra.mxu0 %v1417
    %2283 = vmatprep.subr.bf16.mxu0 %v1426
    %2284 = vmatpush1.bf16.msra.mxu0 %v1425
    %2285 = vmatprep.subr.bf16.mxu0 %v1434
    %2286 = vmatpush1.bf16.msra.mxu0 %v1433
    %2287 = vmatprep.subr.bf16.mxu0 %v1442
    %2288 = vmatpush1.bf16.msra.mxu0 %v1441
    %2289 = vmatprep.subr.bf16.mxu0 %v1450
    %2290 = vmatpush1.bf16.msra.mxu0 %v1449
    %2291 = vmatprep.subr.bf16.mxu0 %v1458
    %2292 = vmatpush1.bf16.msra.mxu0 %v1457
    %2293 = vmatprep.subr.bf16.mxu0 %v1466
    %2294 = vmatpush1.bf16.msra.mxu0 %v1465
    %2295 = vmatprep.subr.bf16.mxu0 %v1474
    %2296 = vmatpush1.bf16.msra.mxu0 %v1473
    %2297 = vmatprep.subr.bf16.mxu0 %v1482
    %2298 = vmatpush1.bf16.msra.mxu0 %v1481
    %2299 = vmatprep.subr.bf16.mxu0 %v1490
    %2300 = vmatpush1.bf16.msra.mxu0 %v1489
    %2301 = vmatprep.subr.bf16.mxu0 %v1498
    %2302 = vmatpush1.bf16.msra.mxu0 %v1497
    %2303 = vmatprep.subr.bf16.mxu0 %v1506
    %2304 = vmatpush1.bf16.msra.mxu0 %v1505
    %2305 = vmatprep.subr.bf16.mxu0 %v1514
    %2306 = vmatpush1.bf16.msra.mxu0 %v1513
    %2307 = vmatprep.mubr.bf16.mxu0 %v420
    %2308 = vmatmul.mubr.bf16.gmra.mrb[0].mxu0 %v419
    %v2309 = vpop.f32.mrb[0].mxu0
    %v2310 = vadd.f32 0.0, %v2309
    %v2311 = vpop.f32.mrb[0].mxu0
    %v2312 = vadd.f32 0.0, %v2311
    %v2313 = vpop.f32.mrb[0].mxu0
    %v2314 = vpop.f32.mrb[0].mxu0
    %2315 = vdwg.mxu0
    %2316 = vmatprep.subr.bf16.mxu0 %v1522
    %2317 = vmatpush1.bf16.msra.mxu0 %v1521
    %2318 = vmatprep.subr.bf16.mxu0 %v1530
    %2319 = vmatpush1.bf16.msra.mxu0 %v1529
    %2320 = vmatprep.subr.bf16.mxu0 %v1538
    %2321 = vmatpush1.bf16.msra.mxu0 %v1537
    %2322 = vmatprep.subr.bf16.mxu0 %v1546
    %2323 = vmatpush1.bf16.msra.mxu0 %v1545
    %2324 = vmatprep.subr.bf16.mxu0 %v1554
    %2325 = vmatpush1.bf16.msra.mxu0 %v1553
    %2326 = vmatprep.subr.bf16.mxu0 %v1562
    %2327 = vmatpush1.bf16.msra.mxu0 %v1561
    %2328 = vmatprep.subr.bf16.mxu0 %v1570
    %2329 = vmatpush1.bf16.msra.mxu0 %v1569
    %2330 = vmatprep.subr.bf16.mxu0 %v1578
    %2331 = vmatpush1.bf16.msra.mxu0 %v1577
    %2332 = vmatprep.subr.bf16.mxu0 %v1586
    %2333 = vmatpush1.bf16.msra.mxu0 %v1585
    %2334 = vmatprep.subr.bf16.mxu0 %v1594
    %2335 = vmatpush1.bf16.msra.mxu0 %v1593
    %2336 = vmatprep.subr.bf16.mxu0 %v1602
    %2337 = vmatpush1.bf16.msra.mxu0 %v1601
    %2338 = vmatprep.subr.bf16.mxu0 %v1610
    %2339 = vmatpush1.bf16.msra.mxu0 %v1609
    %2340 = vmatprep.subr.bf16.mxu0 %v1618
    %2341 = vmatpush1.bf16.msra.mxu0 %v1617
    %2342 = vmatprep.subr.bf16.mxu0 %v1626
    %2343 = vmatpush1.bf16.msra.mxu0 %v1625
    %2344 = vmatprep.subr.bf16.mxu0 %v1634
    %2345 = vmatpush1.bf16.msra.mxu0 %v1633
    %2346 = vmatprep.subr.bf16.mxu0 %v1642
    %2347 = vmatpush1.bf16.msra.mxu0 %v1641
    %2348 = vmatprep.mubr.bf16.mxu0 %v422
    %2349 = vmatmul.mubr.bf16.gmra.mrb[0].mxu0 %v421
    %v2350 = vpop.f32.mrb[0].mxu0
    %v2351 = vadd.f32 %v2310, %v2350
    %v2352 = vpop.f32.mrb[0].mxu0
    %v2353 = vadd.f32 %v2312, %v2352
    %v2354 = vpop.f32.mrb[0].mxu0
    %v2355 = vpop.f32.mrb[0].mxu0
    %2356 = vdwg.mxu0
    %2357 = vmatprep.subr.bf16.mxu0 %v1650
    %2358 = vmatpush1.bf16.msra.mxu0 %v1649
    %2359 = vmatprep.subr.bf16.mxu0 %v1658
    %2360 = vmatpush1.bf16.msra.mxu0 %v1657
    %2361 = vmatprep.subr.bf16.mxu0 %v1666
    %2362 = vmatpush1.bf16.msra.mxu0 %v1665
    %2363 = vmatprep.subr.bf16.mxu0 %v1674
    %2364 = vmatpush1.bf16.msra.mxu0 %v1673
    %2365 = vmatprep.subr.bf16.mxu0 %v1682
    %2366 = vmatpush1.bf16.msra.mxu0 %v1681
    %2367 = vmatprep.subr.bf16.mxu0 %v1690
    %2368 = vmatpush1.bf16.msra.mxu0 %v1689
    %2369 = vmatprep.subr.bf16.mxu0 %v1698
    %2370 = vmatpush1.bf16.msra.mxu0 %v1697
    %2371 = vmatprep.subr.bf16.mxu0 %v1706
    %2372 = vmatpush1.bf16.msra.mxu0 %v1705
    %2373 = vmatprep.subr.bf16.mxu0 0
    %2374 = vmatpush1.bf16.msra.mxu0 0
    %2375 = vmatprep.subr.bf16.mxu0 0
    %2376 = vmatpush1.bf16.msra.mxu0 0
    %2377 = vmatprep.subr.bf16.mxu0 0
    %2378 = vmatpush1.bf16.msra.mxu0 0
    %2379 = vmatprep.subr.bf16.mxu0 0
    %2380 = vmatpush1.bf16.msra.mxu0 0
    %2381 = vmatprep.subr.bf16.mxu0 0
    %2382 = vmatpush1.bf16.msra.mxu0 0
    %2383 = vmatprep.subr.bf16.mxu0 0
    %2384 = vmatpush1.bf16.msra.mxu0 0
    %2385 = vmatprep.subr.bf16.mxu0 0
    %2386 = vmatpush1.bf16.msra.mxu0 0
    %2387 = vmatprep.subr.bf16.mxu0 0
    %2388 = vmatpush1.bf16.msra.mxu0 0
    %2389 = vmatprep.mubr.bf16.mxu0 0
    %2390 = vmatmul.mubr.bf16.gmra.mrb[0].mxu0 %v423
    %v2391 = vpop.f32.mrb[0].mxu0
    %v2392 = vadd.f32 %v2351, %v2391
    %v2393 = vpop.f32.mrb[0].mxu0
    %v2394 = vadd.f32 %v2353, %v2393
    %v2395 = vpop.f32.mrb[0].mxu0
    %v2396 = vpop.f32.mrb[0].mxu0
    %2397 = vdwg.mxu0
    %2398 = vmatprep.subr.bf16.mxu0 %v1396
    %2399 = vmatpush1.bf16.msra.mxu0 %v1395
    %2400 = vmatprep.subr.bf16.mxu0 %v1404
    %2401 = vmatpush1.bf16.msra.mxu0 %v1403
    %2402 = vmatprep.subr.bf16.mxu0 %v1412
    %2403 = vmatpush1.bf16.msra.mxu0 %v1411
    %2404 = vmatprep.subr.bf16.mxu0 %v1420
    %2405 = vmatpush1.bf16.msra.mxu0 %v1419
    %2406 = vmatprep.subr.bf16.mxu0 %v1428
    %2407 = vmatpush1.bf16.msra.mxu0 %v1427
    %2408 = vmatprep.subr.bf16.mxu0 %v1436
    %2409 = vmatpush1.bf16.msra.mxu0 %v1435
    %2410 = vmatprep.subr.bf16.mxu0 %v1444
    %2411 = vmatpush1.bf16.msra.mxu0 %v1443
    %2412 = vmatprep.subr.bf16.mxu0 %v1452
    %2413 = vmatpush1.bf16.msra.mxu0 %v1451
    %2414 = vmatprep.subr.bf16.mxu0 %v1460
    %2415 = vmatpush1.bf16.msra.mxu0 %v1459
    %2416 = vmatprep.subr.bf16.mxu0 %v1468
    %2417 = vmatpush1.bf16.msra.mxu0 %v1467
    %2418 = vmatprep.subr.bf16.mxu0 %v1476
    %2419 = vmatpush1.bf16.msra.mxu0 %v1475
    %2420 = vmatprep.subr.bf16.mxu0 %v1484
    %2421 = vmatpush1.bf16.msra.mxu0 %v1483
    %2422 = vmatprep.subr.bf16.mxu0 %v1492
    %2423 = vmatpush1.bf16.msra.mxu0 %v1491
    %2424 = vmatprep.subr.bf16.mxu0 %v1500
    %2425 = vmatpush1.bf16.msra.mxu0 %v1499
    %2426 = vmatprep.subr.bf16.mxu0 %v1508
    %2427 = vmatpush1.bf16.msra.mxu0 %v1507
    %2428 = vmatprep.subr.bf16.mxu0 %v1516
    %2429 = vmatpush1.bf16.msra.mxu0 %v1515
    %2430 = vmatprep.mubr.bf16.mxu0 %v420
    %2431 = vmatmul.mubr.bf16.gmra.mrb[0].mxu0 %v419
    %v2432 = vpop.f32.mrb[0].mxu0
    %v2433 = vadd.f32 0.0, %v2432
    %v2434 = vpop.f32.mrb[0].mxu0
    %v2435 = vadd.f32 0.0, %v2434
    %v2436 = vpop.f32.mrb[0].mxu0
    %v2437 = vpop.f32.mrb[0].mxu0
    %2438 = vdwg.mxu0
    %2439 = vmatprep.subr.bf16.mxu0 %v1524
    %2440 = vmatpush1.bf16.msra.mxu0 %v1523
    %2441 = vmatprep.subr.bf16.mxu0 %v1532
    %2442 = vmatpush1.bf16.msra.mxu0 %v1531
    %2443 = vmatprep.subr.bf16.mxu0 %v1540
    %2444 = vmatpush1.bf16.msra.mxu0 %v1539
    %2445 = vmatprep.subr.bf16.mxu0 %v1548
    %2446 = vmatpush1.bf16.msra.mxu0 %v1547
    %2447 = vmatprep.subr.bf16.mxu0 %v1556
    %2448 = vmatpush1.bf16.msra.mxu0 %v1555
    %2449 = vmatprep.subr.bf16.mxu0 %v1564
    %2450 = vmatpush1.bf16.msra.mxu0 %v1563
    %2451 = vmatprep.subr.bf16.mxu0 %v1572
    %2452 = vmatpush1.bf16.msra.mxu0 %v1571
    %2453 = vmatprep.subr.bf16.mxu0 %v1580
    %2454 = vmatpush1.bf16.msra.mxu0 %v1579
    %2455 = vmatprep.subr.bf16.mxu0 %v1588
    %2456 = vmatpush1.bf16.msra.mxu0 %v1587
    %2457 = vmatprep.subr.bf16.mxu0 %v1596
    %2458 = vmatpush1.bf16.msra.mxu0 %v1595
    %2459 = vmatprep.subr.bf16.mxu0 %v1604
    %2460 = vmatpush1.bf16.msra.mxu0 %v1603
    %2461 = vmatprep.subr.bf16.mxu0 %v1612
    %2462 = vmatpush1.bf16.msra.mxu0 %v1611
    %2463 = vmatprep.subr.bf16.mxu0 %v1620
    %2464 = vmatpush1.bf16.msra.mxu0 %v1619
    %2465 = vmatprep.subr.bf16.mxu0 %v1628
    %2466 = vmatpush1.bf16.msra.mxu0 %v1627
    %2467 = vmatprep.subr.bf16.mxu0 %v1636
    %2468 = vmatpush1.bf16.msra.mxu0 %v1635
    %2469 = vmatprep.subr.bf16.mxu0 %v1644
    %2470 = vmatpush1.bf16.msra.mxu0 %v1643
    %2471 = vmatprep.mubr.bf16.mxu0 %v422
    %2472 = vmatmul.mubr.bf16.gmra.mrb[0].mxu0 %v421
    %v2473 = vpop.f32.mrb[0].mxu0
    %v2474 = vadd.f32 %v2433, %v2473
    %v2475 = vpop.f32.mrb[0].mxu0
    %v2476 = vadd.f32 %v2435, %v2475
    %v2477 = vpop.f32.mrb[0].mxu0
    %v2478 = vpop.f32.mrb[0].mxu0
    %2479 = vdwg.mxu0
    %2480 = vmatprep.subr.bf16.mxu0 %v1652
    %2481 = vmatpush1.bf16.msra.mxu0 %v1651
    %2482 = vmatprep.subr.bf16.mxu0 %v1660
    %2483 = vmatpush1.bf16.msra.mxu0 %v1659
    %2484 = vmatprep.subr.bf16.mxu0 %v1668
    %2485 = vmatpush1.bf16.msra.mxu0 %v1667
    %2486 = vmatprep.subr.bf16.mxu0 %v1676
    %2487 = vmatpush1.bf16.msra.mxu0 %v1675
    %2488 = vmatprep.subr.bf16.mxu0 %v1684
    %2489 = vmatpush1.bf16.msra.mxu0 %v1683
    %2490 = vmatprep.subr.bf16.mxu0 %v1692
    %2491 = vmatpush1.bf16.msra.mxu0 %v1691
    %2492 = vmatprep.subr.bf16.mxu0 %v1700
    %2493 = vmatpush1.bf16.msra.mxu0 %v1699
    %2494 = vmatprep.subr.bf16.mxu0 %v1708
    %2495 = vmatpush1.bf16.msra.mxu0 %v1707
    %2496 = vmatprep.subr.bf16.mxu0 0
    %2497 = vmatpush1.bf16.msra.mxu0 0
    %2498 = vmatprep.subr.bf16.mxu0 0
    %2499 = vmatpush1.bf16.msra.mxu0 0
    %2500 = vmatprep.subr.bf16.mxu0 0
    %2501 = vmatpush1.bf16.msra.mxu0 0
    %2502 = vmatprep.subr.bf16.mxu0 0
    %2503 = vmatpush1.bf16.msra.mxu0 0
    %2504 = vmatprep.subr.bf16.mxu0 0
    %2505 = vmatpush1.bf16.msra.mxu0 0
    %2506 = vmatprep.subr.bf16.mxu0 0
    %2507 = vmatpush1.bf16.msra.mxu0 0
    %2508 = vmatprep.subr.bf16.mxu0 0
    %2509 = vmatpush1.bf16.msra.mxu0 0
    %2510 = vmatprep.subr.bf16.mxu0 0
    %2511 = vmatpush1.bf16.msra.mxu0 0
    %2512 = vmatprep.mubr.bf16.mxu0 0
    %2513 = vmatmul.mubr.bf16.gmra.mrb[0].mxu0 %v423
    %v2514 = vpop.f32.mrb[0].mxu0
    %v2515 = vadd.f32 %v2474, %v2514
    %v2516 = vpop.f32.mrb[0].mxu0
    %v2517 = vadd.f32 %v2476, %v2516
    %v2518 = vpop.f32.mrb[0].mxu0
    %v2519 = vpop.f32.mrb[0].mxu0
    %2520 = vdwg.mxu0
    %v2521 = vmax.f32 %v2146, 0.0
    %v2522 = vmax.f32 %v2148, 0.0
    %v2523 = vmax.f32 %v2269, 0.0
    %v2524 = vmax.f32 %v2271, 0.0
    %v2525 = vmax.f32 %v2392, 0.0
    %v2526 = vmax.f32 %v2394, 0.0
    %v2527 = vmax.f32 %v2515, 0.0
    %v2528 = vmax.f32 %v2517, 0.0
    %v2529 = vpack.c.bf16 %v2521, %v2521
    %v2530 = vpack.c.bf16 %v2522, %v2522
    %v2531 = vpack.c.bf16 %v2523, %v2523
    %v2532 = vpack.c.bf16 %v2524, %v2524
    %v2533 = vpack.c.bf16 %v2525, %v2525
    %v2534 = vpack.c.bf16 %v2526, %v2526
    %v2535 = vpack.c.bf16 %v2527, %v2527
    %v2536 = vpack.c.bf16 %v2528, %v2528
    %v2537 = vld [vmem:[#allocation4] sm:$0xf]
    %v2538 = vld [vmem:[#allocation4 + $0x4] sm:$0xf]
    %v2539 = vld [vmem:[#allocation4 + $0x8] sm:$0xf]
    %v2540 = vld [vmem:[#allocation4 + $0xc] sm:$0xf]
    %v2541 = vld [vmem:[#allocation4 + $0x10] sm:$0xf]
    %v2542 = vld [vmem:[#allocation4 + $0x14] sm:$0xf]
    %v2543 = vld [vmem:[#allocation4 + $0x18] sm:$0xf]
    %v2544 = vld [vmem:[#allocation4 + $0x1c] sm:$0xf]
    %v2545 = vld [vmem:[#allocation4 + $0x20] sm:$0xf]
    %v2546 = vld [vmem:[#allocation4 + $0x24] sm:$0xf]
    %v2547 = vld [vmem:[#allocation4 + $0x28] sm:$0xf]
    %v2548 = vld [vmem:[#allocation4 + $0x2c] sm:$0xf]
    %v2549 = vld [vmem:[#allocation4 + $0x30] sm:$0xf]
    %v2550 = vld [vmem:[#allocation4 + $0x34] sm:$0xf]
    %v2551 = vld [vmem:[#allocation4 + $0x38] sm:$0xf]
    %v2552 = vld [vmem:[#allocation4 + $0x3c] sm:$0xf]
    %v2553 = vld [vmem:[#allocation4 + $0x40] sm:$0xf]
    %v2554 = vld [vmem:[#allocation4 + $0x44] sm:$0xf]
    %v2555 = vld [vmem:[#allocation4 + $0x48] sm:$0xf]
    %v2556 = vld [vmem:[#allocation4 + $0x4c] sm:$0xf]
    %v2557 = vld [vmem:[#allocation4 + $0x50] sm:$0xf]
    %v2558 = vld [vmem:[#allocation4 + $0x54] sm:$0xf]
    %v2559 = vld [vmem:[#allocation4 + $0x58] sm:$0xf]
    %v2560 = vld [vmem:[#allocation4 + $0x5c] sm:$0xf]
    %v2561 = vld [vmem:[#allocation4 + $0x60] sm:$0xf]
    %v2562 = vld [vmem:[#allocation4 + $0x64] sm:$0xf]
    %v2563 = vld [vmem:[#allocation4 + $0x68] sm:$0xf]
    %v2564 = vld [vmem:[#allocation4 + $0x6c] sm:$0xf]
    %v2565 = vld [vmem:[#allocation4 + $0x70] sm:$0xf]
    %v2566 = vld [vmem:[#allocation4 + $0x74] sm:$0xf]
    %v2567 = vld [vmem:[#allocation4 + $0x78] sm:$0xf]
    %v2568 = vld [vmem:[#allocation4 + $0x7c] sm:$0xf]
    %v2569 = vld [vmem:[#allocation4 + $0x80] sm:$0xf]
    %v2570 = vld [vmem:[#allocation4 + $0x84] sm:$0xf]
    %v2571 = vld [vmem:[#allocation4 + $0x88] sm:$0xf]
    %v2572 = vld [vmem:[#allocation4 + $0x8c] sm:$0xf]
    %v2573 = vld [vmem:[#allocation4 + $0x90] sm:$0xf]
    %v2574 = vld [vmem:[#allocation4 + $0x94] sm:$0xf]
    %v2575 = vld [vmem:[#allocation4 + $0x98] sm:$0xf]
    %v2576 = vld [vmem:[#allocation4 + $0x9c] sm:$0xf]
    %v2577 = vld [vmem:[#allocation4 + $0xa0] sm:$0xf]
    %v2578 = vld [vmem:[#allocation4 + $0xa4] sm:$0xf]
    %v2579 = vld [vmem:[#allocation4 + $0xa8] sm:$0xf]
    %v2580 = vld [vmem:[#allocation4 + $0xac] sm:$0xf]
    %v2581 = vld [vmem:[#allocation4 + $0xb0] sm:$0xf]
    %v2582 = vld [vmem:[#allocation4 + $0xb4] sm:$0xf]
    %v2583 = vld [vmem:[#allocation4 + $0xb8] sm:$0xf]
    %v2584 = vld [vmem:[#allocation4 + $0xbc] sm:$0xf]
    %v2585 = vld [vmem:[#allocation4 + $0xc0] sm:$0xf]
    %v2586 = vld [vmem:[#allocation4 + $0xc4] sm:$0xf]
    %v2587 = vld [vmem:[#allocation4 + $0xc8] sm:$0xf]
    %v2588 = vld [vmem:[#allocation4 + $0xcc] sm:$0xf]
    %v2589 = vld [vmem:[#allocation4 + $0xd0] sm:$0xf]
    %v2590 = vld [vmem:[#allocation4 + $0xd4] sm:$0xf]
    %v2591 = vld [vmem:[#allocation4 + $0xd8] sm:$0xf]
    %v2592 = vld [vmem:[#allocation4 + $0xdc] sm:$0xf]
    %v2593 = vld [vmem:[#allocation4 + $0xe0] sm:$0xf]
    %v2594 = vld [vmem:[#allocation4 + $0xe4] sm:$0xf]
    %v2595 = vld [vmem:[#allocation4 + $0xe8] sm:$0xf]
    %v2596 = vld [vmem:[#allocation4 + $0xec] sm:$0xf]
    %v2597 = vld [vmem:[#allocation4 + $0xf0] sm:$0xf]
    %v2598 = vld [vmem:[#allocation4 + $0xf4] sm:$0xf]
    %v2599 = vld [vmem:[#allocation4 + $0xf8] sm:$0xf]
    %v2600 = vld [vmem:[#allocation4 + $0xfc] sm:$0xf]
    %v2601 = vld [vmem:[#allocation4 + $0x100] sm:$0xf]
    %v2602 = vld [vmem:[#allocation4 + $0x104] sm:$0xf]
    %v2603 = vld [vmem:[#allocation4 + $0x108] sm:$0xf]
    %v2604 = vld [vmem:[#allocation4 + $0x10c] sm:$0xf]
    %v2605 = vld [vmem:[#allocation4 + $0x110] sm:$0xf]
    %v2606 = vld [vmem:[#allocation4 + $0x114] sm:$0xf]
    %v2607 = vld [vmem:[#allocation4 + $0x118] sm:$0xf]
    %v2608 = vld [vmem:[#allocation4 + $0x11c] sm:$0xf]
    %v2609 = vld [vmem:[#allocation4 + $0x120] sm:$0xf]
    %v2610 = vld [vmem:[#allocation4 + $0x124] sm:$0xf]
    %v2611 = vld [vmem:[#allocation4 + $0x128] sm:$0xf]
    %v2612 = vld [vmem:[#allocation4 + $0x12c] sm:$0xf]
    %v2613 = vld [vmem:[#allocation4 + $0x130] sm:$0xf]
    %v2614 = vld [vmem:[#allocation4 + $0x134] sm:$0xf]
    %v2615 = vld [vmem:[#allocation4 + $0x138] sm:$0xf]
    %v2616 = vld [vmem:[#allocation4 + $0x13c] sm:$0xf]
    %v2617 = vld [vmem:[#allocation4 + $0x140] sm:$0xf]
    %v2618 = vld [vmem:[#allocation4 + $0x144] sm:$0xf]
    %v2619 = vld [vmem:[#allocation4 + $0x148] sm:$0xf]
    %v2620 = vld [vmem:[#allocation4 + $0x14c] sm:$0xf]
    %v2621 = vld [vmem:[#allocation4 + $0x150] sm:$0xf]
    %v2622 = vld [vmem:[#allocation4 + $0x154] sm:$0xf]
    %v2623 = vld [vmem:[#allocation4 + $0x158] sm:$0xf]
    %v2624 = vld [vmem:[#allocation4 + $0x15c] sm:$0xf]
    %v2625 = vld [vmem:[#allocation4 + $0x160] sm:$0xf]
    %v2626 = vld [vmem:[#allocation4 + $0x164] sm:$0xf]
    %v2627 = vld [vmem:[#allocation4 + $0x168] sm:$0xf]
    %v2628 = vld [vmem:[#allocation4 + $0x16c] sm:$0xf]
    %v2629 = vld [vmem:[#allocation4 + $0x170] sm:$0xf]
    %v2630 = vld [vmem:[#allocation4 + $0x174] sm:$0xf]
    %v2631 = vld [vmem:[#allocation4 + $0x178] sm:$0xf]
    %v2632 = vld [vmem:[#allocation4 + $0x17c] sm:$0xf]
    %v2633 = vld [vmem:[#allocation4 + $0x180] sm:$0xf]
    %v2634 = vld [vmem:[#allocation4 + $0x184] sm:$0xf]
    %v2635 = vld [vmem:[#allocation4 + $0x188] sm:$0xf]
    %v2636 = vld [vmem:[#allocation4 + $0x18c] sm:$0xf]
    %v2637 = vld [vmem:[#allocation4 + $0x190] sm:$0xf]
    %v2638 = vld [vmem:[#allocation4 + $0x194] sm:$0xf]
    %v2639 = vld [vmem:[#allocation4 + $0x198] sm:$0xf]
    %v2640 = vld [vmem:[#allocation4 + $0x19c] sm:$0xf]
    %v2641 = vld [vmem:[#allocation4 + $0x1a0] sm:$0xf]
    %v2642 = vld [vmem:[#allocation4 + $0x1a4] sm:$0xf]
    %v2643 = vld [vmem:[#allocation4 + $0x1a8] sm:$0xf]
    %v2644 = vld [vmem:[#allocation4 + $0x1ac] sm:$0xf]
    %v2645 = vld [vmem:[#allocation4 + $0x1b0] sm:$0xf]
    %v2646 = vld [vmem:[#allocation4 + $0x1b4] sm:$0xf]
    %v2647 = vld [vmem:[#allocation4 + $0x1b8] sm:$0xf]
    %v2648 = vld [vmem:[#allocation4 + $0x1bc] sm:$0xf]
    %v2649 = vld [vmem:[#allocation4 + $0x1c0] sm:$0xf]
    %v2650 = vld [vmem:[#allocation4 + $0x1c4] sm:$0xf]
    %v2651 = vld [vmem:[#allocation4 + $0x1c8] sm:$0xf]
    %v2652 = vld [vmem:[#allocation4 + $0x1cc] sm:$0xf]
    %v2653 = vld [vmem:[#allocation4 + $0x1d0] sm:$0xf]
    %v2654 = vld [vmem:[#allocation4 + $0x1d4] sm:$0xf]
    %v2655 = vld [vmem:[#allocation4 + $0x1d8] sm:$0xf]
    %v2656 = vld [vmem:[#allocation4 + $0x1dc] sm:$0xf]
    %v2657 = vld [vmem:[#allocation4 + $0x1e0] sm:$0xf]
    %v2658 = vld [vmem:[#allocation4 + $0x1e4] sm:$0xf]
    %v2659 = vld [vmem:[#allocation4 + $0x1e8] sm:$0xf]
    %v2660 = vld [vmem:[#allocation4 + $0x1ec] sm:$0xf]
    %v2661 = vld [vmem:[#allocation4 + $0x1f0] sm:$0xf]
    %v2662 = vld [vmem:[#allocation4 + $0x1f4] sm:$0xf]
    %v2663 = vld [vmem:[#allocation4 + $0x1f8] sm:$0xf]
    %v2664 = vld [vmem:[#allocation4 + $0x1fc] sm:$0xf]
    %v2665 = vld [vmem:[#allocation6] sm:$0x1]
    %v2667 = vlaneseq
    %v2668 = vshrl.u32 %v2667, 7
    %v2669 = vsub.s32 0, %v2668
    %v2670 = vrot.slane %v2665, %v2669
    %v2800 = vunpack.c.l.b16 %v2537
    %v2801 = vunpack.c.l.b16 %v2538
    %v2802 = vunpack.c.l.b16 %v2539
    %v2803 = vunpack.c.l.b16 %v2540
    %v2804 = vunpack.c.l.b16 %v2541
    %v2805 = vunpack.c.l.b16 %v2542
    %v2806 = vunpack.c.l.b16 %v2543
    %v2807 = vunpack.c.l.b16 %v2544
    %v2808 = vunpack.c.l.b16 %v2545
    %v2809 = vunpack.c.l.b16 %v2546
    %v2810 = vunpack.c.l.b16 %v2547
    %v2811 = vunpack.c.l.b16 %v2548
    %v2812 = vunpack.c.l.b16 %v2549
    %v2813 = vunpack.c.l.b16 %v2550
    %v2814 = vunpack.c.l.b16 %v2551
    %v2815 = vunpack.c.l.b16 %v2552
    %v2816 = vunpack.c.l.b16 %v2553
    %v2817 = vunpack.c.l.b16 %v2554
    %v2818 = vunpack.c.l.b16 %v2555
    %v2819 = vunpack.c.l.b16 %v2556
    %v2820 = vunpack.c.l.b16 %v2557
    %v2821 = vunpack.c.l.b16 %v2558
    %v2822 = vunpack.c.l.b16 %v2559
    %v2823 = vunpack.c.l.b16 %v2560
    %v2824 = vunpack.c.l.b16 %v2561
    %v2825 = vunpack.c.l.b16 %v2562
    %v2826 = vunpack.c.l.b16 %v2563
    %v2827 = vunpack.c.l.b16 %v2564
    %v2828 = vunpack.c.l.b16 %v2565
    %v2829 = vunpack.c.l.b16 %v2566
    %v2830 = vunpack.c.l.b16 %v2567
    %v2831 = vunpack.c.l.b16 %v2568
    %v2832 = vunpack.c.l.b16 %v2569
    %v2833 = vunpack.c.l.b16 %v2570
    %v2834 = vunpack.c.l.b16 %v2571
    %v2835 = vunpack.c.l.b16 %v2572
    %v2836 = vunpack.c.l.b16 %v2573
    %v2837 = vunpack.c.l.b16 %v2574
    %v2838 = vunpack.c.l.b16 %v2575
    %v2839 = vunpack.c.l.b16 %v2576
    %v2840 = vunpack.c.l.b16 %v2577
    %v2841 = vunpack.c.l.b16 %v2578
    %v2842 = vunpack.c.l.b16 %v2579
    %v2843 = vunpack.c.l.b16 %v2580
    %v2844 = vunpack.c.l.b16 %v2581
    %v2845 = vunpack.c.l.b16 %v2582
    %v2846 = vunpack.c.l.b16 %v2583
    %v2847 = vunpack.c.l.b16 %v2584
    %v2848 = vunpack.c.l.b16 %v2585
    %v2849 = vunpack.c.l.b16 %v2586
    %v2850 = vunpack.c.l.b16 %v2587
    %v2851 = vunpack.c.l.b16 %v2588
    %v2852 = vunpack.c.l.b16 %v2589
    %v2853 = vunpack.c.l.b16 %v2590
    %v2854 = vunpack.c.l.b16 %v2591
    %v2855 = vunpack.c.l.b16 %v2592
    %v2856 = vunpack.c.l.b16 %v2593
    %v2857 = vunpack.c.l.b16 %v2594
    %v2858 = vunpack.c.l.b16 %v2595
    %v2859 = vunpack.c.l.b16 %v2596
    %v2860 = vunpack.c.l.b16 %v2597
    %v2861 = vunpack.c.l.b16 %v2598
    %v2862 = vunpack.c.l.b16 %v2599
    %v2863 = vunpack.c.l.b16 %v2600
    %v2864 = vunpack.c.l.b16 %v2601
    %v2865 = vunpack.c.l.b16 %v2602
    %v2866 = vunpack.c.l.b16 %v2603
    %v2867 = vunpack.c.l.b16 %v2604
    %v2868 = vunpack.c.l.b16 %v2605
    %v2869 = vunpack.c.l.b16 %v2606
    %v2870 = vunpack.c.l.b16 %v2607
    %v2871 = vunpack.c.l.b16 %v2608
    %v2872 = vunpack.c.l.b16 %v2609
    %v2873 = vunpack.c.l.b16 %v2610
    %v2874 = vunpack.c.l.b16 %v2611
    %v2875 = vunpack.c.l.b16 %v2612
    %v2876 = vunpack.c.l.b16 %v2613
    %v2877 = vunpack.c.l.b16 %v2614
    %v2878 = vunpack.c.l.b16 %v2615
    %v2879 = vunpack.c.l.b16 %v2616
    %v2880 = vunpack.c.l.b16 %v2617
    %v2881 = vunpack.c.l.b16 %v2618
    %v2882 = vunpack.c.l.b16 %v2619
    %v2883 = vunpack.c.l.b16 %v2620
    %v2884 = vunpack.c.l.b16 %v2621
    %v2885 = vunpack.c.l.b16 %v2622
    %v2886 = vunpack.c.l.b16 %v2623
    %v2887 = vunpack.c.l.b16 %v2624
    %v2888 = vunpack.c.l.b16 %v2625
    %v2889 = vunpack.c.l.b16 %v2626
    %v2890 = vunpack.c.l.b16 %v2627
    %v2891 = vunpack.c.l.b16 %v2628
    %v2892 = vunpack.c.l.b16 %v2629
    %v2893 = vunpack.c.l.b16 %v2630
    %v2894 = vunpack.c.l.b16 %v2631
    %v2895 = vunpack.c.l.b16 %v2632
    %v2896 = vunpack.c.l.b16 %v2633
    %v2897 = vunpack.c.l.b16 %v2634
    %v2898 = vunpack.c.l.b16 %v2635
    %v2899 = vunpack.c.l.b16 %v2636
    %v2900 = vunpack.c.l.b16 %v2637
    %v2901 = vunpack.c.l.b16 %v2638
    %v2902 = vunpack.c.l.b16 %v2639
    %v2903 = vunpack.c.l.b16 %v2640
    %v2904 = vunpack.c.l.b16 %v2641
    %v2905 = vunpack.c.l.b16 %v2642
    %v2906 = vunpack.c.l.b16 %v2643
    %v2907 = vunpack.c.l.b16 %v2644
    %v2908 = vunpack.c.l.b16 %v2645
    %v2909 = vunpack.c.l.b16 %v2646
    %v2910 = vunpack.c.l.b16 %v2647
    %v2911 = vunpack.c.l.b16 %v2648
    %v2912 = vunpack.c.l.b16 %v2649
    %v2913 = vunpack.c.l.b16 %v2650
    %v2914 = vunpack.c.l.b16 %v2651
    %v2915 = vunpack.c.l.b16 %v2652
    %v2916 = vunpack.c.l.b16 %v2653
    %v2917 = vunpack.c.l.b16 %v2654
    %v2918 = vunpack.c.l.b16 %v2655
    %v2919 = vunpack.c.l.b16 %v2656
    %v2920 = vunpack.c.l.b16 %v2657
    %v2921 = vunpack.c.l.b16 %v2658
    %v2922 = vunpack.c.l.b16 %v2659
    %v2923 = vunpack.c.l.b16 %v2660
    %v2924 = vunpack.c.l.b16 %v2661
    %v2925 = vunpack.c.l.b16 %v2662
    %v2926 = vunpack.c.l.b16 %v2663
    %v2927 = vunpack.c.l.b16 %v2664
    %v2928 = vpack.c.b16 %v2801, %v2800
    %v2929 = vpack.c.b16 %v2803, %v2802
    %v2930 = vpack.c.b16 %v2805, %v2804
    %v2931 = vpack.c.b16 %v2807, %v2806
    %v2932 = vpack.c.b16 %v2809, %v2808
    %v2933 = vpack.c.b16 %v2811, %v2810
    %v2934 = vpack.c.b16 %v2813, %v2812
    %v2935 = vpack.c.b16 %v2815, %v2814
    %v2936 = vpack.c.b16 %v2817, %v2816
    %v2937 = vpack.c.b16 %v2819, %v2818
    %v2938 = vpack.c.b16 %v2821, %v2820
    %v2939 = vpack.c.b16 %v2823, %v2822
    %v2940 = vpack.c.b16 %v2825, %v2824
    %v2941 = vpack.c.b16 %v2827, %v2826
    %v2942 = vpack.c.b16 %v2829, %v2828
    %v2943 = vpack.c.b16 %v2831, %v2830
    %v2944 = vpack.c.b16 %v2833, %v2832
    %v2945 = vpack.c.b16 %v2835, %v2834
    %v2946 = vpack.c.b16 %v2837, %v2836
    %v2947 = vpack.c.b16 %v2839, %v2838
    %v2948 = vpack.c.b16 %v2841, %v2840
    %v2949 = vpack.c.b16 %v2843, %v2842
    %v2950 = vpack.c.b16 %v2845, %v2844
    %v2951 = vpack.c.b16 %v2847, %v2846
    %v2952 = vpack.c.b16 %v2849, %v2848
    %v2953 = vpack.c.b16 %v2851, %v2850
    %v2954 = vpack.c.b16 %v2853, %v2852
    %v2955 = vpack.c.b16 %v2855, %v2854
    %v2956 = vpack.c.b16 %v2857, %v2856
    %v2957 = vpack.c.b16 %v2859, %v2858
    %v2958 = vpack.c.b16 %v2861, %v2860
    %v2959 = vpack.c.b16 %v2863, %v2862
    %v2960 = vpack.c.b16 %v2865, %v2864
    %v2961 = vpack.c.b16 %v2867, %v2866
    %v2962 = vpack.c.b16 %v2869, %v2868
    %v2963 = vpack.c.b16 %v2871, %v2870
    %v2964 = vpack.c.b16 %v2873, %v2872
    %v2965 = vpack.c.b16 %v2875, %v2874
    %v2966 = vpack.c.b16 %v2877, %v2876
    %v2967 = vpack.c.b16 %v2879, %v2878
    %v2968 = vpack.c.b16 %v2881, %v2880
    %v2969 = vpack.c.b16 %v2883, %v2882
    %v2970 = vpack.c.b16 %v2885, %v2884
    %v2971 = vpack.c.b16 %v2887, %v2886
    %v2972 = vpack.c.b16 %v2889, %v2888
    %v2973 = vpack.c.b16 %v2891, %v2890
    %v2974 = vpack.c.b16 %v2893, %v2892
    %v2975 = vpack.c.b16 %v2895, %v2894
    %v2976 = vpack.c.b16 %v2897, %v2896
    %v2977 = vpack.c.b16 %v2899, %v2898
    %v2978 = vpack.c.b16 %v2901, %v2900
    %v2979 = vpack.c.b16 %v2903, %v2902
    %v2980 = vpack.c.b16 %v2905, %v2904
    %v2981 = vpack.c.b16 %v2907, %v2906
    %v2982 = vpack.c.b16 %v2909, %v2908
    %v2983 = vpack.c.b16 %v2911, %v2910
    %v2984 = vpack.c.b16 %v2913, %v2912
    %v2985 = vpack.c.b16 %v2915, %v2914
    %v2986 = vpack.c.b16 %v2917, %v2916
    %v2987 = vpack.c.b16 %v2919, %v2918
    %v2988 = vpack.c.b16 %v2921, %v2920
    %v2989 = vpack.c.b16 %v2923, %v2922
    %v2990 = vpack.c.b16 %v2925, %v2924
    %v2991 = vpack.c.b16 %v2927, %v2926
    %3056 = vmatprep.subr.bf16.mxu0 0
    %3057 = vmatpush1.bf16.msra.mxu0 %v2928
    %3058 = vmatprep.subr.bf16.mxu0 0
    %3059 = vmatpush1.bf16.msra.mxu0 %v2929
    %3060 = vmatprep.subr.bf16.mxu0 0
    %3061 = vmatpush1.bf16.msra.mxu0 %v2930
    %3062 = vmatprep.subr.bf16.mxu0 0
    %3063 = vmatpush1.bf16.msra.mxu0 %v2931
    %3064 = vmatprep.subr.bf16.mxu0 0
    %3065 = vmatpush1.bf16.msra.mxu0 %v2932
    %3066 = vmatprep.subr.bf16.mxu0 0
    %3067 = vmatpush1.bf16.msra.mxu0 %v2933
    %3068 = vmatprep.subr.bf16.mxu0 0
    %3069 = vmatpush1.bf16.msra.mxu0 %v2934
    %3070 = vmatprep.subr.bf16.mxu0 0
    %3071 = vmatpush1.bf16.msra.mxu0 %v2935
    %3072 = vmatprep.subr.bf16.mxu0 0
    %3073 = vmatpush1.bf16.msra.mxu0 %v2936
    %3074 = vmatprep.subr.bf16.mxu0 0
    %3075 = vmatpush1.bf16.msra.mxu0 %v2937
    %3076 = vmatprep.subr.bf16.mxu0 0
    %3077 = vmatpush1.bf16.msra.mxu0 %v2938
    %3078 = vmatprep.subr.bf16.mxu0 0
    %3079 = vmatpush1.bf16.msra.mxu0 %v2939
    %3080 = vmatprep.subr.bf16.mxu0 0
    %3081 = vmatpush1.bf16.msra.mxu0 %v2940
    %3082 = vmatprep.subr.bf16.mxu0 0
    %3083 = vmatpush1.bf16.msra.mxu0 %v2941
    %3084 = vmatprep.subr.bf16.mxu0 0
    %3085 = vmatpush1.bf16.msra.mxu0 %v2942
    %3086 = vmatprep.subr.bf16.mxu0 0
    %3087 = vmatpush1.bf16.msra.mxu0 %v2943
    %3088 = vmatprep.mubr.bf16.mxu0 %v2530
    %3089 = vmatmul.mubr.bf16.gmra.mrb[0].mxu0 %v2529
    %v3090 = vpop.f32.mrb[0].mxu0
    %v3091 = vadd.f32 %v2670, %v3090
    %v3092 = vpop.f32.mrb[0].mxu0
    %v3093 = vpop.f32.mrb[0].mxu0
    %v3094 = vpop.f32.mrb[0].mxu0
    %3095 = vdwg.mxu0
    %3096 = vmatprep.subr.bf16.mxu0 0
    %3097 = vmatpush1.bf16.msra.mxu0 %v2944
    %3098 = vmatprep.subr.bf16.mxu0 0
    %3099 = vmatpush1.bf16.msra.mxu0 %v2945
    %3100 = vmatprep.subr.bf16.mxu0 0
    %3101 = vmatpush1.bf16.msra.mxu0 %v2946
    %3102 = vmatprep.subr.bf16.mxu0 0
    %3103 = vmatpush1.bf16.msra.mxu0 %v2947
    %3104 = vmatprep.subr.bf16.mxu0 0
    %3105 = vmatpush1.bf16.msra.mxu0 %v2948
    %3106 = vmatprep.subr.bf16.mxu0 0
    %3107 = vmatpush1.bf16.msra.mxu0 %v2949
    %3108 = vmatprep.subr.bf16.mxu0 0
    %3109 = vmatpush1.bf16.msra.mxu0 %v2950
    %3110 = vmatprep.subr.bf16.mxu0 0
    %3111 = vmatpush1.bf16.msra.mxu0 %v2951
    %3112 = vmatprep.subr.bf16.mxu0 0
    %3113 = vmatpush1.bf16.msra.mxu0 %v2952
    %3114 = vmatprep.subr.bf16.mxu0 0
    %3115 = vmatpush1.bf16.msra.mxu0 %v2953
    %3116 = vmatprep.subr.bf16.mxu0 0
    %3117 = vmatpush1.bf16.msra.mxu0 %v2954
    %3118 = vmatprep.subr.bf16.mxu0 0
    %3119 = vmatpush1.bf16.msra.mxu0 %v2955
    %3120 = vmatprep.subr.bf16.mxu0 0
    %3121 = vmatpush1.bf16.msra.mxu0 %v2956
    %3122 = vmatprep.subr.bf16.mxu0 0
    %3123 = vmatpush1.bf16.msra.mxu0 %v2957
    %3124 = vmatprep.subr.bf16.mxu0 0
    %3125 = vmatpush1.bf16.msra.mxu0 %v2958
    %3126 = vmatprep.subr.bf16.mxu0 0
    %3127 = vmatpush1.bf16.msra.mxu0 %v2959
    %3128 = vmatprep.mubr.bf16.mxu0 %v2532
    %3129 = vmatmul.mubr.bf16.gmra.mrb[0].mxu0 %v2531
    %v3130 = vpop.f32.mrb[0].mxu0
    %v3131 = vadd.f32 %v3091, %v3130
    %v3132 = vpop.f32.mrb[0].mxu0
    %v3133 = vpop.f32.mrb[0].mxu0
    %v3134 = vpop.f32.mrb[0].mxu0
    %3135 = vdwg.mxu0
    %3136 = vmatprep.subr.bf16.mxu0 0
    %3137 = vmatpush1.bf16.msra.mxu0 %v2960
    %3138 = vmatprep.subr.bf16.mxu0 0
    %3139 = vmatpush1.bf16.msra.mxu0 %v2961
    %3140 = vmatprep.subr.bf16.mxu0 0
    %3141 = vmatpush1.bf16.msra.mxu0 %v2962
    %3142 = vmatprep.subr.bf16.mxu0 0
    %3143 = vmatpush1.bf16.msra.mxu0 %v2963
    %3144 = vmatprep.subr.bf16.mxu0 0
    %3145 = vmatpush1.bf16.msra.mxu0 %v2964
    %3146 = vmatprep.subr.bf16.mxu0 0
    %3147 = vmatpush1.bf16.msra.mxu0 %v2965
    %3148 = vmatprep.subr.bf16.mxu0 0
    %3149 = vmatpush1.bf16.msra.mxu0 %v2966
    %3150 = vmatprep.subr.bf16.mxu0 0
    %3151 = vmatpush1.bf16.msra.mxu0 %v2967
    %3152 = vmatprep.subr.bf16.mxu0 0
    %3153 = vmatpush1.bf16.msra.mxu0 %v2968
    %3154 = vmatprep.subr.bf16.mxu0 0
    %3155 = vmatpush1.bf16.msra.mxu0 %v2969
    %3156 = vmatprep.subr.bf16.mxu0 0
    %3157 = vmatpush1.bf16.msra.mxu0 %v2970
    %3158 = vmatprep.subr.bf16.mxu0 0
    %3159 = vmatpush1.bf16.msra.mxu0 %v2971
    %3160 = vmatprep.subr.bf16.mxu0 0
    %3161 = vmatpush1.bf16.msra.mxu0 %v2972
    %3162 = vmatprep.subr.bf16.mxu0 0
    %3163 = vmatpush1.bf16.msra.mxu0 %v2973
    %3164 = vmatprep.subr.bf16.mxu0 0
    %3165 = vmatpush1.bf16.msra.mxu0 %v2974
    %3166 = vmatprep.subr.bf16.mxu0 0
    %3167 = vmatpush1.bf16.msra.mxu0 %v2975
    %3168 = vmatprep.mubr.bf16.mxu0 %v2534
    %3169 = vmatmul.mubr.bf16.gmra.mrb[0].mxu0 %v2533
    %v3170 = vpop.f32.mrb[0].mxu0
    %v3171 = vadd.f32 %v3131, %v3170
    %v3172 = vpop.f32.mrb[0].mxu0
    %v3173 = vpop.f32.mrb[0].mxu0
    %v3174 = vpop.f32.mrb[0].mxu0
    %3175 = vdwg.mxu0
    %3176 = vmatprep.subr.bf16.mxu0 0
    %3177 = vmatpush1.bf16.msra.mxu0 %v2976
    %3178 = vmatprep.subr.bf16.mxu0 0
    %3179 = vmatpush1.bf16.msra.mxu0 %v2977
    %3180 = vmatprep.subr.bf16.mxu0 0
    %3181 = vmatpush1.bf16.msra.mxu0 %v2978
    %3182 = vmatprep.subr.bf16.mxu0 0
    %3183 = vmatpush1.bf16.msra.mxu0 %v2979
    %3184 = vmatprep.subr.bf16.mxu0 0
    %3185 = vmatpush1.bf16.msra.mxu0 %v2980
    %3186 = vmatprep.subr.bf16.mxu0 0
    %3187 = vmatpush1.bf16.msra.mxu0 %v2981
    %3188 = vmatprep.subr.bf16.mxu0 0
    %3189 = vmatpush1.bf16.msra.mxu0 %v2982
    %3190 = vmatprep.subr.bf16.mxu0 0
    %3191 = vmatpush1.bf16.msra.mxu0 %v2983
    %3192 = vmatprep.subr.bf16.mxu0 0
    %3193 = vmatpush1.bf16.msra.mxu0 %v2984
    %3194 = vmatprep.subr.bf16.mxu0 0
    %3195 = vmatpush1.bf16.msra.mxu0 %v2985
    %3196 = vmatprep.subr.bf16.mxu0 0
    %3197 = vmatpush1.bf16.msra.mxu0 %v2986
    %3198 = vmatprep.subr.bf16.mxu0 0
    %3199 = vmatpush1.bf16.msra.mxu0 %v2987
    %3200 = vmatprep.subr.bf16.mxu0 0
    %3201 = vmatpush1.bf16.msra.mxu0 %v2988
    %3202 = vmatprep.subr.bf16.mxu0 0
    %3203 = vmatpush1.bf16.msra.mxu0 %v2989
    %3204 = vmatprep.subr.bf16.mxu0 0
    %3205 = vmatpush1.bf16.msra.mxu0 %v2990
    %3206 = vmatprep.subr.bf16.mxu0 0
    %3207 = vmatpush1.bf16.msra.mxu0 %v2991
    %3208 = vmatprep.mubr.bf16.mxu0 %v2536
    %3209 = vmatmul.mubr.bf16.gmra.mrb[0].mxu0 %v2535
    %v3210 = vpop.f32.mrb[0].mxu0
    %v3211 = vadd.f32 %v3171, %v3210
    %v3212 = vpop.f32.mrb[0].mxu0
    %v3213 = vpop.f32.mrb[0].mxu0
    %v3214 = vpop.f32.mrb[0].mxu0
    %3215 = vdwg.mxu0
    %v3216 = vmax.f32 %v3211, 0.0
    %v3217 = vpack.c.bf16 %v3216, %v3216
    %v3218 = vld [vmem:[#allocation7] sm:$0xf]
    %v3219 = vld [vmem:[#allocation7 + $0x4] sm:$0xf]
    %v3220 = vld [vmem:[#allocation7 + $0x8] sm:$0xf]
    %v3221 = vld [vmem:[#allocation7 + $0xc] sm:$0xf]
    %v3222 = vld [vmem:[#allocation7 + $0x10] sm:$0xf]
    %v3223 = vld [vmem:[#allocation7 + $0x14] sm:$0xf]
    %v3224 = vld [vmem:[#allocation7 + $0x18] sm:$0xf]
    %v3225 = vld [vmem:[#allocation7 + $0x1c] sm:$0xf]
    %v3226 = vld [vmem:[#allocation7 + $0x20] sm:$0xf]
    %v3227 = vld [vmem:[#allocation7 + $0x24] sm:$0xf]
    %v3228 = vld [vmem:[#allocation7 + $0x28] sm:$0xf]
    %v3229 = vld [vmem:[#allocation7 + $0x2c] sm:$0xf]
    %v3230 = vld [vmem:[#allocation7 + $0x30] sm:$0xf]
    %v3231 = vld [vmem:[#allocation7 + $0x34] sm:$0xf]
    %v3232 = vld [vmem:[#allocation7 + $0x38] sm:$0xf]
    %v3233 = vld [vmem:[#allocation7 + $0x3c] sm:$0xf]
    %v3234 = vld [vmem:[#allocation9] sm:$0x1]
    %v3236 = vlaneseq
    %v3237 = vshrl.u32 %v3236, 7
    %v3238 = vsub.s32 0, %v3237
    %v3239 = vrot.slane %v3234, %v3238
    %v3257 = vunpack.c.l.b16 %v3218
    %v3258 = vunpack.c.l.b16 %v3219
    %v3259 = vunpack.c.l.b16 %v3220
    %v3260 = vunpack.c.l.b16 %v3221
    %v3261 = vunpack.c.l.b16 %v3222
    %v3262 = vunpack.c.l.b16 %v3223
    %v3263 = vunpack.c.l.b16 %v3224
    %v3264 = vunpack.c.l.b16 %v3225
    %v3265 = vunpack.c.l.b16 %v3226
    %v3266 = vunpack.c.l.b16 %v3227
    %v3267 = vunpack.c.l.b16 %v3228
    %v3268 = vunpack.c.l.b16 %v3229
    %v3269 = vunpack.c.l.b16 %v3230
    %v3270 = vunpack.c.l.b16 %v3231
    %v3271 = vunpack.c.l.b16 %v3232
    %v3272 = vunpack.c.l.b16 %v3233
    %v3273 = vpack.c.b16 %v3258, %v3257
    %v3274 = vpack.c.b16 %v3260, %v3259
    %v3275 = vpack.c.b16 %v3262, %v3261
    %v3276 = vpack.c.b16 %v3264, %v3263
    %v3277 = vpack.c.b16 %v3266, %v3265
    %v3278 = vpack.c.b16 %v3268, %v3267
    %v3279 = vpack.c.b16 %v3270, %v3269
    %v3280 = vpack.c.b16 %v3272, %v3271
    %3289 = vmatprep.subr.bf16.mxu0 0
    %3290 = vmatpush1.bf16.msra.mxu0 %v3273
    %3291 = vmatprep.subr.bf16.mxu0 0
    %3292 = vmatpush1.bf16.msra.mxu0 %v3274
    %3293 = vmatprep.subr.bf16.mxu0 0
    %3294 = vmatpush1.bf16.msra.mxu0 %v3275
    %3295 = vmatprep.subr.bf16.mxu0 0
    %3296 = vmatpush1.bf16.msra.mxu0 %v3276
    %3297 = vmatprep.subr.bf16.mxu0 0
    %3298 = vmatpush1.bf16.msra.mxu0 %v3277
    %3299 = vmatprep.subr.bf16.mxu0 0
    %3300 = vmatpush1.bf16.msra.mxu0 %v3278
    %3301 = vmatprep.subr.bf16.mxu0 0
    %3302 = vmatpush1.bf16.msra.mxu0 %v3279
    %3303 = vmatprep.subr.bf16.mxu0 0
    %3304 = vmatpush1.bf16.msra.mxu0 %v3280
    %3305 = vmatprep.subr.bf16.mxu0 0
    %3306 = vmatpush1.bf16.msra.mxu0 0
    %3307 = vmatprep.subr.bf16.mxu0 0
    %3308 = vmatpush1.bf16.msra.mxu0 0
    %3309 = vmatprep.subr.bf16.mxu0 0
    %3310 = vmatpush1.bf16.msra.mxu0 0
    %3311 = vmatprep.subr.bf16.mxu0 0
    %3312 = vmatpush1.bf16.msra.mxu0 0
    %3313 = vmatprep.subr.bf16.mxu0 0
    %3314 = vmatpush1.bf16.msra.mxu0 0
    %3315 = vmatprep.subr.bf16.mxu0 0
    %3316 = vmatpush1.bf16.msra.mxu0 0
    %3317 = vmatprep.subr.bf16.mxu0 0
    %3318 = vmatpush1.bf16.msra.mxu0 0
    %3319 = vmatprep.subr.bf16.mxu0 0
    %3320 = vmatpush1.bf16.msra.mxu0 0
    %3321 = vmatprep.mubr.bf16.mxu0 0
    %3322 = vmatmul.mubr.bf16.gmra.mrb[0].mxu0 %v3217
    %v3323 = vpop.f32.mrb[0].mxu0
    %v3324 = vadd.f32 %v3239, %v3323
    %v3325 = vpop.f32.mrb[0].mxu0
    %v3326 = vpop.f32.mrb[0].mxu0
    %v3327 = vpop.f32.mrb[0].mxu0
    %3328 = vdwg.mxu0
    %3329 = vst [vmem:[%s6] sm:$0xff] %v3324
    // Predicated region
    $region46: #{qnetwork_forward.1} parent=1 // pred_check
      _
    $region47: #{qnetwork_forward.1} parent=1 // pred_check_branch
      %3331 = sbr.rel (0) target = $region49
    $region48: #{qnetwork_forward.1} parent=1 // pred_region
      _
    $region49: #{qnetwork_forward.1} parent=1 // pred_fallthru
      _
    // Predicated region
    $region50: #{qnetwork_forward.1} parent=1 // pred_check
      _
    $region51: #{qnetwork_forward.1} parent=1 // pred_check_branch
      %3333 = sbr.rel (0) target = $region53
    $region52: #{qnetwork_forward.1} parent=1 // pred_region
      _
    $region53: #{qnetwork_forward.1} parent=1 // pred_fallthru
      _
    %3334 = vsyncpa [#allocation3], 1
    %3335 = vsyncpa [#allocation5], 1
    %3336 = vsyncpa [#allocation8], 1

</llo_original>
